<compile_context>
chip_gen: v7x
topology: tpu7x:2x2x1
jax: 0.10.0
libtpu: 0.0.40
codegen_flags: <defaults>
</compile_context>

<pallas_src>
import functools

import jax
import jax.numpy as jnp
from jax.experimental import pallas as pl
from jax.experimental.pallas import tpu as pltpu


def _round_up(x, m):
    return (x + m - 1) // m * m


def _vmem_limit_bytes(nbytes):
    # Explicit scoped-VMEM budget: never below any chip's default (32 MiB),
    # never above v7x's 64 MiB physical ceiling.
    return int(min(64 * 2**20, max(32 * 2**20, int(1.5 * nbytes))))


# ---------------------------------------------------------------------------
# Recurrent GRU kernel: grid (batch tile, time chunk); h carried in scratch.
# ---------------------------------------------------------------------------
def gru_recurrent_kernel(gi_ref, w_hh_ref, b_hn_ref, hs_ref, h_sc, hs_stage):
    """gi_ref  : (Tc, TB, 3H) x-side gate pre-activations (biases folded)
       w_hh_ref: (H, 3H)      recurrent weight (constant block, fetched once)
       b_hn_ref: (1, H)       hidden bias of the n gate (cannot fold into gi)
       hs_ref  : (TB, Tc, H)  batch-first hidden-state slab for this chunk
       h_sc    : (TB, H) f32  h carry across time chunks (persistent scratch)
       hs_stage: (TB, Tc, H) f32 staging buffer -> one full-block store/chunk
    """
    H = h_sc.shape[1]
    Tc = gi_ref.shape[0]

    @pl.when(pl.program_id(1) == 0)
    def _():                                  # hidden=None -> zero init
        h_sc[...] = jnp.zeros_like(h_sc)

    # Hoist weight/bias loads and the bias broadcast out of the unrolled loop.
    w_hh = w_hh_ref[...]
    b_hn = jnp.broadcast_to(b_hn_ref[...].astype(jnp.float32), h_sc.shape)

    h = h_sc[...]
    for i in range(Tc):                       # static unroll of the chunk
        gi = gi_ref[i].astype(jnp.float32)                       # (TB, 3H)
        gh = jnp.dot(h.astype(w_hh.dtype), w_hh,
                     preferred_element_type=jnp.float32)         # (TB, 3H)
        # PyTorch gate order r, z, n; splits are lane-aligned (H % 128 == 0).
        r = jax.nn.sigmoid(gi[:, :H] + gh[:, :H])
        z = jax.nn.sigmoid(gi[:, H:2 * H] + gh[:, H:2 * H])
        n = jnp.tanh(gi[:, 2 * H:] + r * (gh[:, 2 * H:] + b_hn))
        h = (1.0 - z) * n + z * h
        hs_stage[:, i, :] = h                 # static index -> cheap view
    hs_ref[...] = hs_stage[...].astype(hs_ref.dtype)
    h_sc[...] = h


# ---------------------------------------------------------------------------
# Deferred output projection: (rows, H) x (H, TN) with a tiled vocab axis.
# ---------------------------------------------------------------------------
def fc_projection_kernel(h_ref, w_ref, b_ref, o_ref):
    acc = jnp.dot(h_ref[...].astype(w_ref.dtype), w_ref[...],
                  preferred_element_type=jnp.float32)
    o_ref[...] = (acc + b_ref[...].astype(jnp.float32)).astype(o_ref.dtype)


def decoder_gru_forward(x_tokens, params, *,
                        weight_dtype=jnp.float32, slab_dtype=jnp.float32):
    """x_tokens: int32 (B, T).  Returns (logits (B,T,V), hidden (1,B,H))."""
    emb = params["embedding"]          # (V, E)
    w_ih = params["w_ih"]              # (E, 3H)  gate order r|z|n
    w_hh = params["w_hh"]              # (H, 3H)
    b_ih = params["b_ih"]              # (1, 3H)
    b_hh = params["b_hh"]              # (1, 3H)
    w_fc = params["w_fc"]              # (H, V)
    b_fc = params["b_fc"]              # (1, V)

    B, T = x_tokens.shape
    V, E = emb.shape
    H = w_hh.shape[0]
    f32 = jnp.float32
    slab_bytes = jnp.dtype(slab_dtype).itemsize
    w_bytes = jnp.dtype(weight_dtype).itemsize

    # --- TPU-friendly padded sizes ------------------------------------------
    Bp = _round_up(B, 8)
    Hp = _round_up(H, 128)
    Vp = _round_up(V, 512) if V > 512 else _round_up(V, 128)

    # Time chunk: the grid walks chunks serially; the chunk is a static unroll.
    if T <= 8:
        Tc, Tp = T, T
    else:
        Tc = 16 if slab_bytes < 4 else 8      # bf16 packs 2 rows / sublane
        Tp = _round_up(T, Tc)

    # Batch tile: as large as possible for MXU rows, but >=2 tiles when the
    # batch allows it so v7x's second TensorCore gets work.
    min_tile = 16 if slab_bytes < 4 else 8
    if Bp >= 2 * min_tile:
        TB = next((c for c in (256, 128, 64, 32, 16, 8)
                   if min_tile <= c <= Bp // 2 and Bp % c == 0), Bp)
    else:
        TB = Bp

    # Keep streamed + staged blocks modest so double buffering fits the v7x
    # 64 MiB VMEM budget even at large H (W_hh is resident on top of this).
    def _rec_blocks_bytes(tb):
        return (2 * Tc * tb * 3 * Hp * slab_bytes     # gi, double-buffered
                + 2 * tb * Tc * Hp * slab_bytes       # hs, double-buffered
                + tb * Tc * Hp * 4                    # staging scratch
                + tb * Hp * 4)                        # h carry scratch
    while TB > min_tile and Bp % (TB // 2) == 0 and \
            _rec_blocks_bytes(TB) > 24 * 2**20:
        TB //= 2
    nb, nt = Bp // TB, Tp // Tc

    # --- weight / bias padding (per-gate, so r|z|n stay lane-aligned) -------
    def pad_gates(a):
        X = a.shape[0]
        a3 = a.reshape(X, 3, H)
        a3 = jnp.pad(a3, ((0, 0), (0, 0), (0, Hp - H)))
        return a3.reshape(X, 3 * Hp)

    w_ih_p = pad_gates(w_ih.astype(f32))                                   # (E, 3Hp)
    w_hh_p = jnp.pad(pad_gates(w_hh.astype(f32)), ((0, Hp - H), (0, 0)))   # (Hp, 3Hp)
    b_ih_p = pad_gates(b_ih.astype(f32))                                   # (1, 3Hp)
    b_hh_p = pad_gates(b_hh.astype(f32))                                   # (1, 3Hp)
    w_fc_p = jnp.pad(w_fc.astype(f32), ((0, Hp - H), (0, Vp - V)))         # (Hp, Vp)
    b_fc_p = jnp.pad(b_fc.astype(f32), ((0, 0), (0, Vp - V)))              # (1, Vp)
    b_hn_p = b_hh_p[:, 2 * Hp:]                                            # (1, Hp)

    # Fold biases: b_ih fully + b_hh for r/z gates; only b_hn (inside the
    # r * (.) term) must stay separate.
    bias_gi = b_ih_p + jnp.concatenate(
        [b_hh_p[:, :2 * Hp], jnp.zeros((1, Hp), f32)], axis=1)             # (1, 3Hp)

    # --- hoisted x-side gate pre-activations (wrapper / XLA glue) -----------
    tok_p = jnp.pad(x_tokens, ((0, Bp - B), (0, Tp - T)))                  # (Bp, Tp)
    tok_tm = tok_p.T                                                       # (Tp, Bp)
    emb_f = emb.astype(f32)
    if V <= Bp * Tp:
        # Small vocab: fuse emb @ W_ih (+ folded biases) into a (V, 3Hp)
        # table once and gather rows, skipping the (Tp*Bp, E) GEMM.
        table = jnp.dot(emb_f.astype(weight_dtype), w_ih_p.astype(weight_dtype),
                        preferred_element_type=f32) + bias_gi              # (V, 3Hp)
        gi = table[tok_tm]                                                 # (Tp, Bp, 3Hp)
    else:
        embedded = emb_f[tok_tm]                                           # (Tp, Bp, E)
        gi = (jnp.dot(embedded.reshape(Tp * Bp, E).astype(weight_dtype),
                      w_ih_p.astype(weight_dtype),
                      preferred_element_type=f32).reshape(Tp, Bp, 3 * Hp)
              + bias_gi)
    gi = gi.astype(slab_dtype)

    # --- recurrent kernel ----------------------------------------------------
    rec_vmem = _rec_blocks_bytes(TB) + 2 * Hp * 3 * Hp * w_bytes + 2 * Hp * 4
    hs = pl.pallas_call(
        gru_recurrent_kernel,
        out_shape=jax.ShapeDtypeStruct((Bp, Tp, Hp), slab_dtype),
        grid_spec=pltpu.PrefetchScalarGridSpec(
            num_scalar_prefetch=0,
            grid=(nb, nt),                    # batch parallel, time serial
            in_specs=[
                pl.BlockSpec((Tc, TB, 3 * Hp), lambda b, t: (t, b, 0)),   # gi chunk
                pl.BlockSpec((Hp, 3 * Hp), lambda b, t: (0, 0)),          # W_hh
                pl.BlockSpec((1, Hp), lambda b, t: (0, 0)),               # b_hn
            ],
            out_specs=pl.BlockSpec((TB, Tc, Hp), lambda b, t: (b, t, 0)),  # hs chunk
            scratch_shapes=[
                pltpu.VMEM((TB, Hp), f32),        # h carry across chunks
                pltpu.VMEM((TB, Tc, Hp), f32),    # per-chunk staging buffer
            ],
        ),
        compiler_params=pltpu.CompilerParams(
            dimension_semantics=("parallel", "arbitrary"),
            vmem_limit_bytes=_vmem_limit_bytes(rec_vmem),
        ),
    )(gi, w_hh_p.astype(weight_dtype), b_hn_p)

    # --- deferred fc projection: batched GEMM, vocab-tiled, batch-first -----
    rows = Bp * Tp
    hs_flat = hs.reshape(rows, Hp)            # contiguous reshape (free)
    if rows <= 16:
        TM = rows
    else:
        TM = next(c for c in (512, 256, 128, 64, 32, 16, 8)
                  if c <= rows // 2 and rows % c == 0)
    TN = min(Vp, 512)                         # Vp is a multiple of 512 when >512
    nm, nv = rows // TM, Vp // TN

    fc_vmem = (2 * TM * Hp * slab_bytes + 2 * Hp * TN * w_bytes
               + 2 * TM * TN * 4 + 2 * TN * 4)
    logits_flat = pl.pallas_call(
        fc_projection_kernel,
        out_shape=jax.ShapeDtypeStruct((rows, Vp), f32),
        grid_spec=pltpu.PrefetchScalarGridSpec(
            num_scalar_prefetch=0,
            grid=(nm, nv),
            in_specs=[
                pl.BlockSpec((TM, Hp), lambda m, v: (m, 0)),
                pl.BlockSpec((Hp, TN), lambda m, v: (0, v)),              # W_fc tile
                pl.BlockSpec((1, TN), lambda m, v: (0, v)),               # b_fc tile
            ],
            out_specs=pl.BlockSpec((TM, TN), lambda m, v: (m, v)),
        ),
        compiler_params=pltpu.CompilerParams(
            dimension_semantics=("parallel", "parallel"),
            vmem_limit_bytes=_vmem_limit_bytes(fc_vmem),
        ),
    )(hs_flat, w_fc_p.astype(weight_dtype), b_fc_p)

    # Batch-first everywhere -> no transpose; just strip padding.
    logits = logits_flat.reshape(Bp, Tp, Vp)[:B, :T, :V]
    hidden = hs[:B, T - 1, :H].astype(f32)[None, :, :]      # (num_layers=1, B, H)
    return logits, hidden


def reference_forward(x_tokens, params):
    """Pure-JAX reference replicating torch GRU semantics for verification."""
    emb = params["embedding"]
    w_ih, w_hh = params["w_ih"], params["w_hh"]
    b_ih, b_hh = params["b_ih"][0], params["b_hh"][0]
    w_fc, b_fc = params["w_fc"], params["b_fc"][0]
    H = w_hh.shape[0]
    embedded = emb[x_tokens].astype(jnp.float32)     # (B, T, E)

    def step(h, x_t):
        gi = x_t @ w_ih + b_ih
        gh = h @ w_hh + b_hh
        i_r, i_z, i_n = gi[:, :H], gi[:, H:2 * H], gi[:, 2 * H:]
        h_r, h_z, h_n = gh[:, :H], gh[:, H:2 * H], gh[:, 2 * H:]
        r = jax.nn.sigmoid(i_r + h_r)
        z = jax.nn.sigmoid(i_z + h_z)
        n = jnp.tanh(i_n + r * h_n)
        h_new = (1.0 - z) * n + z * h
        return h_new, h_new

    h0 = jnp.zeros((x_tokens.shape[0], H), jnp.float32)
    hT, hs = jax.lax.scan(step, h0, jnp.transpose(embedded, (1, 0, 2)))
    outputs = jnp.transpose(hs, (1, 0, 2))           # (B, T, H)
    logits = outputs @ w_fc + b_fc
    return logits, hT[None, :, :]


def make_params(key, vocab_size, embedding_dim, hidden_size):
    ks = jax.random.split(key, 7)
    s = 1.0 / jnp.sqrt(hidden_size)
    return {
        "embedding": jax.random.normal(ks[0], (vocab_size, embedding_dim), jnp.float32),
        # Stored transposed vs. torch (torch: (3H, E) / (3H, H)); gate order r,z,n.
        "w_ih": jax.random.uniform(ks[1], (embedding_dim, 3 * hidden_size), jnp.float32, -s, s),
        "w_hh": jax.random.uniform(ks[2], (hidden_size, 3 * hidden_size), jnp.float32, -s, s),
        "b_ih": jax.random.uniform(ks[3], (1, 3 * hidden_size), jnp.float32, -s, s),
        "b_hh": jax.random.uniform(ks[4], (1, 3 * hidden_size), jnp.float32, -s, s),
        "w_fc": jax.random.uniform(ks[5], (hidden_size, vocab_size), jnp.float32, -s, s),
        "b_fc": jax.random.uniform(ks[6], (1, vocab_size), jnp.float32, -s, s),
    }


if __name__ == "__main__":
    vocab_size, embedding_dim, hidden_size = 64, 32, 32
    batch, seq = 4, 8

    key = jax.random.PRNGKey(0)
    pkey, xkey = jax.random.split(key)
    params = make_params(pkey, vocab_size, embedding_dim, hidden_size)
    x = jax.random.randint(xkey, (batch, seq), 0, vocab_size, dtype=jnp.int32)

    ref_logits, ref_hidden = reference_forward(x, params)

    # f32 slabs / f32 weights: tight correctness check.
    fwd = jax.jit(decoder_gru_forward)
    logits, hidden = jax.block_until_ready(fwd(x, params))
    assert logits.shape == (batch, seq, vocab_size)
    assert hidden.shape == (1, batch, hidden_size)
    assert jnp.allclose(logits, ref_logits, atol=1e-4, rtol=1e-4)
    assert jnp.allclose(hidden, ref_hidden, atol=1e-4, rtol=1e-4)

    # Production config: bf16 slabs + bf16 MXU operands, f32 gate math/accum.
    fwd_bf16 = jax.jit(functools.partial(decoder_gru_forward,
                                         weight_dtype=jnp.bfloat16,
                                         slab_dtype=jnp.bfloat16))
    logits_b, hidden_b = jax.block_until_ready(fwd_bf16(x, params))
    assert logits_b.shape == (batch, seq, vocab_size)
    assert jnp.allclose(logits_b, ref_logits, atol=1e-1, rtol=1e-1)
    assert jnp.allclose(hidden_b, ref_hidden, atol=1e-1, rtol=1e-1)

    print("KERNEL_OK")
</pallas_src>

<mosaic_0001>
module attributes {stable_mosaic.version = 11 : i64} {
  func.func @gru_recurrent_kernel(%arg0: i32, %arg1: i32, %arg2: memref<8x8x384xf32, #tpu.memory_space<vmem>>, %arg3: memref<128x384xf32, #tpu.memory_space<vmem>>, %arg4: memref<1x128xf32, #tpu.memory_space<vmem>>, %arg5: memref<8x8x128xf32, #tpu.memory_space<vmem>>, %arg6: memref<8x128xf32, #tpu.memory_space<vmem>>, %arg7: memref<8x8x128xf32, #tpu.memory_space<vmem>>) attributes {dimension_semantics = [#tpu.dimension_semantics<parallel>, #tpu.dimension_semantics<arbitrary>], iteration_bounds = array<i64: 1, 1>, scalar_prefetch = 0 : i64, scratch_operands = 2 : i64, tpu.core_type = #tpu.core_type<tc>, window_params = [{transform_indices = @transform_0, window_bounds = array<i64: 8, 8, 384>}, {pipeline_mode = #tpu.pipeline_mode<synchronous>, transform_indices = @transform_1, window_bounds = array<i64: 128, 384>}, {pipeline_mode = #tpu.pipeline_mode<synchronous>, transform_indices = @transform_2, window_bounds = array<i64: 1, 128>}, {transform_indices = @transform_3, window_bounds = array<i64: 8, 8, 128>}]} {
    %c0_i32 = arith.constant 0 : i32
    %0 = arith.cmpi eq, %arg1, %c0_i32 : i32
    %1 = arith.extui %0 : i1 to i32
    %c0_i32_0 = arith.constant 0 : i32
    %2 = arith.cmpi ne, %1, %c0_i32_0 : i32
    scf.if %2 {
      %cst_86 = arith.constant 0.000000e+00 : f32
      %275 = vector.broadcast %cst_86 : f32 to vector<8x128xf32>
      %c0_87 = arith.constant 0 : index
      %c0_88 = arith.constant 0 : index
      %276 = vector.load %arg6[%c0_87, %c0_88] : memref<8x128xf32, #tpu.memory_space<vmem>>, vector<8x128xf32>
      tpu.vector_store %arg6[%c0_87, %c0_88], %275 {strides = array<i32>} : memref<8x128xf32, #tpu.memory_space<vmem>>, vector<8x128xf32>,
    } else {
    }
    %c0 = arith.constant 0 : index
    %c0_1 = arith.constant 0 : index
    %3 = vector.load %arg3[%c0, %c0_1] : memref<128x384xf32, #tpu.memory_space<vmem>>, vector<128x384xf32>
    %c0_2 = arith.constant 0 : index
    %c0_3 = arith.constant 0 : index
    %4 = vector.load %arg4[%c0_2, %c0_3] : memref<1x128xf32, #tpu.memory_space<vmem>>, vector<1x128xf32>
    %5 = vector.shape_cast %4 : vector<1x128xf32> to vector<1x128xf32>
    %6 = vector.broadcast %5 : vector<1x128xf32> to vector<8x128xf32>
    %c0_4 = arith.constant 0 : index
    %c0_5 = arith.constant 0 : index
    %7 = vector.load %arg6[%c0_4, %c0_5] : memref<8x128xf32, #tpu.memory_space<vmem>>, vector<8x128xf32>
    %c0_6 = arith.constant 0 : index
    %c0_7 = arith.constant 0 : index
    %c0_8 = arith.constant 0 : index
    %8 = vector.load %arg2[%c0_6, %c0_7, %c0_8] : memref<8x8x384xf32, #tpu.memory_space<vmem>>, vector<1x8x384xf32>
    %9 = vector.shape_cast %8 : vector<1x8x384xf32> to vector<8x384xf32>
    %cst = arith.constant dense<0.000000e+00> : vector<8x384xf32>
    %10 = tpu.matmul %7, %3, %cst {dimension_numbers = #tpu.dot_dimension_numbers<[1], [0], [0], [1], [0, 0, 1, 1], [], []>} : vector<8x128xf32>, vector<128x384xf32>, vector<8x384xf32> -> vector<8x384xf32>
    %11 = vector.extract_strided_slice %9 {offsets = [0, 0], sizes = [8, 128], strides = [1, 1]} : vector<8x384xf32> to vector<8x128xf32>
    %12 = vector.extract_strided_slice %10 {offsets = [0, 0], sizes = [8, 128], strides = [1, 1]} : vector<8x384xf32> to vector<8x128xf32>
    %13 = arith.addf %11, %12 : vector<8x128xf32>
    %14 = arith.negf %13 : vector<8x128xf32>
    %15 = math.exp %14 : vector<8x128xf32>
    %cst_9 = arith.constant 1.000000e+00 : f32
    %16 = vector.broadcast %cst_9 : f32 to vector<8x128xf32>
    %17 = arith.addf %16, %15 : vector<8x128xf32>
    %18 = arith.divf %16, %17 : vector<8x128xf32>
    %19 = vector.extract_strided_slice %9 {offsets = [0, 128], sizes = [8, 128], strides = [1, 1]} : vector<8x384xf32> to vector<8x128xf32>
    %20 = vector.extract_strided_slice %10 {offsets = [0, 128], sizes = [8, 128], strides = [1, 1]} : vector<8x384xf32> to vector<8x128xf32>
    %21 = arith.addf %19, %20 : vector<8x128xf32>
    %22 = arith.negf %21 : vector<8x128xf32>
    %23 = math.exp %22 : vector<8x128xf32>
    %cst_10 = arith.constant 1.000000e+00 : f32
    %24 = vector.broadcast %cst_10 : f32 to vector<8x128xf32>
    %25 = arith.addf %24, %23 : vector<8x128xf32>
    %26 = arith.divf %24, %25 : vector<8x128xf32>
    %27 = vector.extract_strided_slice %9 {offsets = [0, 256], sizes = [8, 128], strides = [1, 1]} : vector<8x384xf32> to vector<8x128xf32>
    %28 = vector.extract_strided_slice %10 {offsets = [0, 256], sizes = [8, 128], strides = [1, 1]} : vector<8x384xf32> to vector<8x128xf32>
    %29 = arith.addf %28, %6 : vector<8x128xf32>
    %30 = arith.mulf %18, %29 : vector<8x128xf32>
    %31 = arith.addf %27, %30 : vector<8x128xf32>
    %32 = math.tanh %31 : vector<8x128xf32>
    %cst_11 = arith.constant 1.000000e+00 : f32
    %33 = vector.broadcast %cst_11 : f32 to vector<8x128xf32>
    %34 = arith.subf %33, %26 : vector<8x128xf32>
    %35 = arith.mulf %34, %32 : vector<8x128xf32>
    %36 = arith.mulf %26, %7 : vector<8x128xf32>
    %37 = arith.addf %35, %36 : vector<8x128xf32>
    %c0_12 = arith.constant 0 : index
    %c0_13 = arith.constant 0 : index
    %c0_14 = arith.constant 0 : index
    %38 = vector.load %arg7[%c0_12, %c0_13, %c0_14] : memref<8x8x128xf32, #tpu.memory_space<vmem>>, vector<8x1x128xf32>
    %39 = vector.shape_cast %38 : vector<8x1x128xf32> to vector<8x128xf32>
    %40 = vector.shape_cast %37 : vector<8x128xf32> to vector<8x1x128xf32>
    tpu.vector_store %arg7[%c0_12, %c0_13, %c0_14], %40 {strides = array<i32>} : memref<8x8x128xf32, #tpu.memory_space<vmem>>, vector<8x1x128xf32>,
    %c1 = arith.constant 1 : index
    %c0_15 = arith.constant 0 : index
    %c0_16 = arith.constant 0 : index
    %41 = vector.load %arg2[%c1, %c0_15, %c0_16] : memref<8x8x384xf32, #tpu.memory_space<vmem>>, vector<1x8x384xf32>
    %42 = vector.shape_cast %41 : vector<1x8x384xf32> to vector<8x384xf32>
    %cst_17 = arith.constant dense<0.000000e+00> : vector<8x384xf32>
    %43 = tpu.matmul %37, %3, %cst_17 {dimension_numbers = #tpu.dot_dimension_numbers<[1], [0], [0], [1], [0, 0, 1, 1], [], []>} : vector<8x128xf32>, vector<128x384xf32>, vector<8x384xf32> -> vector<8x384xf32>
    %44 = vector.extract_strided_slice %42 {offsets = [0, 0], sizes = [8, 128], strides = [1, 1]} : vector<8x384xf32> to vector<8x128xf32>
    %45 = vector.extract_strided_slice %43 {offsets = [0, 0], sizes = [8, 128], strides = [1, 1]} : vector<8x384xf32> to vector<8x128xf32>
    %46 = arith.addf %44, %45 : vector<8x128xf32>
    %47 = arith.negf %46 : vector<8x128xf32>
    %48 = math.exp %47 : vector<8x128xf32>
    %cst_18 = arith.constant 1.000000e+00 : f32
    %49 = vector.broadcast %cst_18 : f32 to vector<8x128xf32>
    %50 = arith.addf %49, %48 : vector<8x128xf32>
    %51 = arith.divf %49, %50 : vector<8x128xf32>
    %52 = vector.extract_strided_slice %42 {offsets = [0, 128], sizes = [8, 128], strides = [1, 1]} : vector<8x384xf32> to vector<8x128xf32>
    %53 = vector.extract_strided_slice %43 {offsets = [0, 128], sizes = [8, 128], strides = [1, 1]} : vector<8x384xf32> to vector<8x128xf32>
    %54 = arith.addf %52, %53 : vector<8x128xf32>
    %55 = arith.negf %54 : vector<8x128xf32>
    %56 = math.exp %55 : vector<8x128xf32>
    %cst_19 = arith.constant 1.000000e+00 : f32
    %57 = vector.broadcast %cst_19 : f32 to vector<8x128xf32>
    %58 = arith.addf %57, %56 : vector<8x128xf32>
    %59 = arith.divf %57, %58 : vector<8x128xf32>
    %60 = vector.extract_strided_slice %42 {offsets = [0, 256], sizes = [8, 128], strides = [1, 1]} : vector<8x384xf32> to vector<8x128xf32>
    %61 = vector.extract_strided_slice %43 {offsets = [0, 256], sizes = [8, 128], strides = [1, 1]} : vector<8x384xf32> to vector<8x128xf32>
    %62 = arith.addf %61, %6 : vector<8x128xf32>
    %63 = arith.mulf %51, %62 : vector<8x128xf32>
    %64 = arith.addf %60, %63 : vector<8x128xf32>
    %65 = math.tanh %64 : vector<8x128xf32>
    %cst_20 = arith.constant 1.000000e+00 : f32
    %66 = vector.broadcast %cst_20 : f32 to vector<8x128xf32>
    %67 = arith.subf %66, %59 : vector<8x128xf32>
    %68 = arith.mulf %67, %65 : vector<8x128xf32>
    %69 = arith.mulf %59, %37 : vector<8x128xf32>
    %70 = arith.addf %68, %69 : vector<8x128xf32>
    %c0_21 = arith.constant 0 : index
    %c1_22 = arith.constant 1 : index
    %c0_23 = arith.constant 0 : index
    %71 = vector.load %arg7[%c0_21, %c1_22, %c0_23] : memref<8x8x128xf32, #tpu.memory_space<vmem>>, vector<8x1x128xf32>
    %72 = vector.shape_cast %71 : vector<8x1x128xf32> to vector<8x128xf32>
    %73 = vector.shape_cast %70 : vector<8x128xf32> to vector<8x1x128xf32>
    tpu.vector_store %arg7[%c0_21, %c1_22, %c0_23], %73 {strides = array<i32>} : memref<8x8x128xf32, #tpu.memory_space<vmem>>, vector<8x1x128xf32>,
    %c2 = arith.constant 2 : index
    %c0_24 = arith.constant 0 : index
    %c0_25 = arith.constant 0 : index
    %74 = vector.load %arg2[%c2, %c0_24, %c0_25] : memref<8x8x384xf32, #tpu.memory_space<vmem>>, vector<1x8x384xf32>
    %75 = vector.shape_cast %74 : vector<1x8x384xf32> to vector<8x384xf32>
    %cst_26 = arith.constant dense<0.000000e+00> : vector<8x384xf32>
    %76 = tpu.matmul %70, %3, %cst_26 {dimension_numbers = #tpu.dot_dimension_numbers<[1], [0], [0], [1], [0, 0, 1, 1], [], []>} : vector<8x128xf32>, vector<128x384xf32>, vector<8x384xf32> -> vector<8x384xf32>
    %77 = vector.extract_strided_slice %75 {offsets = [0, 0], sizes = [8, 128], strides = [1, 1]} : vector<8x384xf32> to vector<8x128xf32>
    %78 = vector.extract_strided_slice %76 {offsets = [0, 0], sizes = [8, 128], strides = [1, 1]} : vector<8x384xf32> to vector<8x128xf32>
    %79 = arith.addf %77, %78 : vector<8x128xf32>
    %80 = arith.negf %79 : vector<8x128xf32>
    %81 = math.exp %80 : vector<8x128xf32>
    %cst_27 = arith.constant 1.000000e+00 : f32
    %82 = vector.broadcast %cst_27 : f32 to vector<8x128xf32>
    %83 = arith.addf %82, %81 : vector<8x128xf32>
    %84 = arith.divf %82, %83 : vector<8x128xf32>
    %85 = vector.extract_strided_slice %75 {offsets = [0, 128], sizes = [8, 128], strides = [1, 1]} : vector<8x384xf32> to vector<8x128xf32>
    %86 = vector.extract_strided_slice %76 {offsets = [0, 128], sizes = [8, 128], strides = [1, 1]} : vector<8x384xf32> to vector<8x128xf32>
    %87 = arith.addf %85, %86 : vector<8x128xf32>
    %88 = arith.negf %87 : vector<8x128xf32>
    %89 = math.exp %88 : vector<8x128xf32>
    %cst_28 = arith.constant 1.000000e+00 : f32
    %90 = vector.broadcast %cst_28 : f32 to vector<8x128xf32>
    %91 = arith.addf %90, %89 : vector<8x128xf32>
    %92 = arith.divf %90, %91 : vector<8x128xf32>
    %93 = vector.extract_strided_slice %75 {offsets = [0, 256], sizes = [8, 128], strides = [1, 1]} : vector<8x384xf32> to vector<8x128xf32>
    %94 = vector.extract_strided_slice %76 {offsets = [0, 256], sizes = [8, 128], strides = [1, 1]} : vector<8x384xf32> to vector<8x128xf32>
    %95 = arith.addf %94, %6 : vector<8x128xf32>
    %96 = arith.mulf %84, %95 : vector<8x128xf32>
    %97 = arith.addf %93, %96 : vector<8x128xf32>
    %98 = math.tanh %97 : vector<8x128xf32>
    %cst_29 = arith.constant 1.000000e+00 : f32
    %99 = vector.broadcast %cst_29 : f32 to vector<8x128xf32>
    %100 = arith.subf %99, %92 : vector<8x128xf32>
    %101 = arith.mulf %100, %98 : vector<8x128xf32>
    %102 = arith.mulf %92, %70 : vector<8x128xf32>
    %103 = arith.addf %101, %102 : vector<8x128xf32>
    %c0_30 = arith.constant 0 : index
    %c2_31 = arith.constant 2 : index
    %c0_32 = arith.constant 0 : index
    %104 = vector.load %arg7[%c0_30, %c2_31, %c0_32] : memref<8x8x128xf32, #tpu.memory_space<vmem>>, vector<8x1x128xf32>
    %105 = vector.shape_cast %104 : vector<8x1x128xf32> to vector<8x128xf32>
    %106 = vector.shape_cast %103 : vector<8x128xf32> to vector<8x1x128xf32>
    tpu.vector_store %arg7[%c0_30, %c2_31, %c0_32], %106 {strides = array<i32>} : memref<8x8x128xf32, #tpu.memory_space<vmem>>, vector<8x1x128xf32>,
    %c3 = arith.constant 3 : index
    %c0_33 = arith.constant 0 : index
    %c0_34 = arith.constant 0 : index
    %107 = vector.load %arg2[%c3, %c0_33, %c0_34] : memref<8x8x384xf32, #tpu.memory_space<vmem>>, vector<1x8x384xf32>
    %108 = vector.shape_cast %107 : vector<1x8x384xf32> to vector<8x384xf32>
    %cst_35 = arith.constant dense<0.000000e+00> : vector<8x384xf32>
    %109 = tpu.matmul %103, %3, %cst_35 {dimension_numbers = #tpu.dot_dimension_numbers<[1], [0], [0], [1], [0, 0, 1, 1], [], []>} : vector<8x128xf32>, vector<128x384xf32>, vector<8x384xf32> -> vector<8x384xf32>
    %110 = vector.extract_strided_slice %108 {offsets = [0, 0], sizes = [8, 128], strides = [1, 1]} : vector<8x384xf32> to vector<8x128xf32>
    %111 = vector.extract_strided_slice %109 {offsets = [0, 0], sizes = [8, 128], strides = [1, 1]} : vector<8x384xf32> to vector<8x128xf32>
    %112 = arith.addf %110, %111 : vector<8x128xf32>
    %113 = arith.negf %112 : vector<8x128xf32>
    %114 = math.exp %113 : vector<8x128xf32>
    %cst_36 = arith.constant 1.000000e+00 : f32
    %115 = vector.broadcast %cst_36 : f32 to vector<8x128xf32>
    %116 = arith.addf %115, %114 : vector<8x128xf32>
    %117 = arith.divf %115, %116 : vector<8x128xf32>
    %118 = vector.extract_strided_slice %108 {offsets = [0, 128], sizes = [8, 128], strides = [1, 1]} : vector<8x384xf32> to vector<8x128xf32>
    %119 = vector.extract_strided_slice %109 {offsets = [0, 128], sizes = [8, 128], strides = [1, 1]} : vector<8x384xf32> to vector<8x128xf32>
    %120 = arith.addf %118, %119 : vector<8x128xf32>
    %121 = arith.negf %120 : vector<8x128xf32>
    %122 = math.exp %121 : vector<8x128xf32>
    %cst_37 = arith.constant 1.000000e+00 : f32
    %123 = vector.broadcast %cst_37 : f32 to vector<8x128xf32>
    %124 = arith.addf %123, %122 : vector<8x128xf32>
    %125 = arith.divf %123, %124 : vector<8x128xf32>
    %126 = vector.extract_strided_slice %108 {offsets = [0, 256], sizes = [8, 128], strides = [1, 1]} : vector<8x384xf32> to vector<8x128xf32>
    %127 = vector.extract_strided_slice %109 {offsets = [0, 256], sizes = [8, 128], strides = [1, 1]} : vector<8x384xf32> to vector<8x128xf32>
    %128 = arith.addf %127, %6 : vector<8x128xf32>
    %129 = arith.mulf %117, %128 : vector<8x128xf32>
    %130 = arith.addf %126, %129 : vector<8x128xf32>
    %131 = math.tanh %130 : vector<8x128xf32>
    %cst_38 = arith.constant 1.000000e+00 : f32
    %132 = vector.broadcast %cst_38 : f32 to vector<8x128xf32>
    %133 = arith.subf %132, %125 : vector<8x128xf32>
    %134 = arith.mulf %133, %131 : vector<8x128xf32>
    %135 = arith.mulf %125, %103 : vector<8x128xf32>
    %136 = arith.addf %134, %135 : vector<8x128xf32>
    %c0_39 = arith.constant 0 : index
    %c3_40 = arith.constant 3 : index
    %c0_41 = arith.constant 0 : index
    %137 = vector.load %arg7[%c0_39, %c3_40, %c0_41] : memref<8x8x128xf32, #tpu.memory_space<vmem>>, vector<8x1x128xf32>
    %138 = vector.shape_cast %137 : vector<8x1x128xf32> to vector<8x128xf32>
    %139 = vector.shape_cast %136 : vector<8x128xf32> to vector<8x1x128xf32>
    tpu.vector_store %arg7[%c0_39, %c3_40, %c0_41], %139 {strides = array<i32>} : memref<8x8x128xf32, #tpu.memory_space<vmem>>, vector<8x1x128xf32>,
    %c4 = arith.constant 4 : index
    %c0_42 = arith.constant 0 : index
    %c0_43 = arith.constant 0 : index
    %140 = vector.load %arg2[%c4, %c0_42, %c0_43] : memref<8x8x384xf32, #tpu.memory_space<vmem>>, vector<1x8x384xf32>
    %141 = vector.shape_cast %140 : vector<1x8x384xf32> to vector<8x384xf32>
    %cst_44 = arith.constant dense<0.000000e+00> : vector<8x384xf32>
    %142 = tpu.matmul %136, %3, %cst_44 {dimension_numbers = #tpu.dot_dimension_numbers<[1], [0], [0], [1], [0, 0, 1, 1], [], []>} : vector<8x128xf32>, vector<128x384xf32>, vector<8x384xf32> -> vector<8x384xf32>
    %143 = vector.extract_strided_slice %141 {offsets = [0, 0], sizes = [8, 128], strides = [1, 1]} : vector<8x384xf32> to vector<8x128xf32>
    %144 = vector.extract_strided_slice %142 {offsets = [0, 0], sizes = [8, 128], strides = [1, 1]} : vector<8x384xf32> to vector<8x128xf32>
    %145 = arith.addf %143, %144 : vector<8x128xf32>
    %146 = arith.negf %145 : vector<8x128xf32>
    %147 = math.exp %146 : vector<8x128xf32>
    %cst_45 = arith.constant 1.000000e+00 : f32
    %148 = vector.broadcast %cst_45 : f32 to vector<8x128xf32>
    %149 = arith.addf %148, %147 : vector<8x128xf32>
    %150 = arith.divf %148, %149 : vector<8x128xf32>
    %151 = vector.extract_strided_slice %141 {offsets = [0, 128], sizes = [8, 128], strides = [1, 1]} : vector<8x384xf32> to vector<8x128xf32>
    %152 = vector.extract_strided_slice %142 {offsets = [0, 128], sizes = [8, 128], strides = [1, 1]} : vector<8x384xf32> to vector<8x128xf32>
    %153 = arith.addf %151, %152 : vector<8x128xf32>
    %154 = arith.negf %153 : vector<8x128xf32>
    %155 = math.exp %154 : vector<8x128xf32>
    %cst_46 = arith.constant 1.000000e+00 : f32
    %156 = vector.broadcast %cst_46 : f32 to vector<8x128xf32>
    %157 = arith.addf %156, %155 : vector<8x128xf32>
    %158 = arith.divf %156, %157 : vector<8x128xf32>
    %159 = vector.extract_strided_slice %141 {offsets = [0, 256], sizes = [8, 128], strides = [1, 1]} : vector<8x384xf32> to vector<8x128xf32>
    %160 = vector.extract_strided_slice %142 {offsets = [0, 256], sizes = [8, 128], strides = [1, 1]} : vector<8x384xf32> to vector<8x128xf32>
    %161 = arith.addf %160, %6 : vector<8x128xf32>
    %162 = arith.mulf %150, %161 : vector<8x128xf32>
    %163 = arith.addf %159, %162 : vector<8x128xf32>
    %164 = math.tanh %163 : vector<8x128xf32>
    %cst_47 = arith.constant 1.000000e+00 : f32
    %165 = vector.broadcast %cst_47 : f32 to vector<8x128xf32>
    %166 = arith.subf %165, %158 : vector<8x128xf32>
    %167 = arith.mulf %166, %164 : vector<8x128xf32>
    %168 = arith.mulf %158, %136 : vector<8x128xf32>
    %169 = arith.addf %167, %168 : vector<8x128xf32>
    %c0_48 = arith.constant 0 : index
    %c4_49 = arith.constant 4 : index
    %c0_50 = arith.constant 0 : index
    %170 = vector.load %arg7[%c0_48, %c4_49, %c0_50] : memref<8x8x128xf32, #tpu.memory_space<vmem>>, vector<8x1x128xf32>
    %171 = vector.shape_cast %170 : vector<8x1x128xf32> to vector<8x128xf32>
    %172 = vector.shape_cast %169 : vector<8x128xf32> to vector<8x1x128xf32>
    tpu.vector_store %arg7[%c0_48, %c4_49, %c0_50], %172 {strides = array<i32>} : memref<8x8x128xf32, #tpu.memory_space<vmem>>, vector<8x1x128xf32>,
    %c5 = arith.constant 5 : index
    %c0_51 = arith.constant 0 : index
    %c0_52 = arith.constant 0 : index
    %173 = vector.load %arg2[%c5, %c0_51, %c0_52] : memref<8x8x384xf32, #tpu.memory_space<vmem>>, vector<1x8x384xf32>
    %174 = vector.shape_cast %173 : vector<1x8x384xf32> to vector<8x384xf32>
    %cst_53 = arith.constant dense<0.000000e+00> : vector<8x384xf32>
    %175 = tpu.matmul %169, %3, %cst_53 {dimension_numbers = #tpu.dot_dimension_numbers<[1], [0], [0], [1], [0, 0, 1, 1], [], []>} : vector<8x128xf32>, vector<128x384xf32>, vector<8x384xf32> -> vector<8x384xf32>
    %176 = vector.extract_strided_slice %174 {offsets = [0, 0], sizes = [8, 128], strides = [1, 1]} : vector<8x384xf32> to vector<8x128xf32>
    %177 = vector.extract_strided_slice %175 {offsets = [0, 0], sizes = [8, 128], strides = [1, 1]} : vector<8x384xf32> to vector<8x128xf32>
    %178 = arith.addf %176, %177 : vector<8x128xf32>
    %179 = arith.negf %178 : vector<8x128xf32>
    %180 = math.exp %179 : vector<8x128xf32>
    %cst_54 = arith.constant 1.000000e+00 : f32
    %181 = vector.broadcast %cst_54 : f32 to vector<8x128xf32>
    %182 = arith.addf %181, %180 : vector<8x128xf32>
    %183 = arith.divf %181, %182 : vector<8x128xf32>
    %184 = vector.extract_strided_slice %174 {offsets = [0, 128], sizes = [8, 128], strides = [1, 1]} : vector<8x384xf32> to vector<8x128xf32>
    %185 = vector.extract_strided_slice %175 {offsets = [0, 128], sizes = [8, 128], strides = [1, 1]} : vector<8x384xf32> to vector<8x128xf32>
    %186 = arith.addf %184, %185 : vector<8x128xf32>
    %187 = arith.negf %186 : vector<8x128xf32>
    %188 = math.exp %187 : vector<8x128xf32>
    %cst_55 = arith.constant 1.000000e+00 : f32
    %189 = vector.broadcast %cst_55 : f32 to vector<8x128xf32>
    %190 = arith.addf %189, %188 : vector<8x128xf32>
    %191 = arith.divf %189, %190 : vector<8x128xf32>
    %192 = vector.extract_strided_slice %174 {offsets = [0, 256], sizes = [8, 128], strides = [1, 1]} : vector<8x384xf32> to vector<8x128xf32>
    %193 = vector.extract_strided_slice %175 {offsets = [0, 256], sizes = [8, 128], strides = [1, 1]} : vector<8x384xf32> to vector<8x128xf32>
    %194 = arith.addf %193, %6 : vector<8x128xf32>
    %195 = arith.mulf %183, %194 : vector<8x128xf32>
    %196 = arith.addf %192, %195 : vector<8x128xf32>
    %197 = math.tanh %196 : vector<8x128xf32>
    %cst_56 = arith.constant 1.000000e+00 : f32
    %198 = vector.broadcast %cst_56 : f32 to vector<8x128xf32>
    %199 = arith.subf %198, %191 : vector<8x128xf32>
    %200 = arith.mulf %199, %197 : vector<8x128xf32>
    %201 = arith.mulf %191, %169 : vector<8x128xf32>
    %202 = arith.addf %200, %201 : vector<8x128xf32>
    %c0_57 = arith.constant 0 : index
    %c5_58 = arith.constant 5 : index
    %c0_59 = arith.constant 0 : index
    %203 = vector.load %arg7[%c0_57, %c5_58, %c0_59] : memref<8x8x128xf32, #tpu.memory_space<vmem>>, vector<8x1x128xf32>
    %204 = vector.shape_cast %203 : vector<8x1x128xf32> to vector<8x128xf32>
    %205 = vector.shape_cast %202 : vector<8x128xf32> to vector<8x1x128xf32>
    tpu.vector_store %arg7[%c0_57, %c5_58, %c0_59], %205 {strides = array<i32>} : memref<8x8x128xf32, #tpu.memory_space<vmem>>, vector<8x1x128xf32>,
    %c6 = arith.constant 6 : index
    %c0_60 = arith.constant 0 : index
    %c0_61 = arith.constant 0 : index
    %206 = vector.load %arg2[%c6, %c0_60, %c0_61] : memref<8x8x384xf32, #tpu.memory_space<vmem>>, vector<1x8x384xf32>
    %207 = vector.shape_cast %206 : vector<1x8x384xf32> to vector<8x384xf32>
    %cst_62 = arith.constant dense<0.000000e+00> : vector<8x384xf32>
    %208 = tpu.matmul %202, %3, %cst_62 {dimension_numbers = #tpu.dot_dimension_numbers<[1], [0], [0], [1], [0, 0, 1, 1], [], []>} : vector<8x128xf32>, vector<128x384xf32>, vector<8x384xf32> -> vector<8x384xf32>
    %209 = vector.extract_strided_slice %207 {offsets = [0, 0], sizes = [8, 128], strides = [1, 1]} : vector<8x384xf32> to vector<8x128xf32>
    %210 = vector.extract_strided_slice %208 {offsets = [0, 0], sizes = [8, 128], strides = [1, 1]} : vector<8x384xf32> to vector<8x128xf32>
    %211 = arith.addf %209, %210 : vector<8x128xf32>
    %212 = arith.negf %211 : vector<8x128xf32>
    %213 = math.exp %212 : vector<8x128xf32>
    %cst_63 = arith.constant 1.000000e+00 : f32
    %214 = vector.broadcast %cst_63 : f32 to vector<8x128xf32>
    %215 = arith.addf %214, %213 : vector<8x128xf32>
    %216 = arith.divf %214, %215 : vector<8x128xf32>
    %217 = vector.extract_strided_slice %207 {offsets = [0, 128], sizes = [8, 128], strides = [1, 1]} : vector<8x384xf32> to vector<8x128xf32>
    %218 = vector.extract_strided_slice %208 {offsets = [0, 128], sizes = [8, 128], strides = [1, 1]} : vector<8x384xf32> to vector<8x128xf32>
    %219 = arith.addf %217, %218 : vector<8x128xf32>
    %220 = arith.negf %219 : vector<8x128xf32>
    %221 = math.exp %220 : vector<8x128xf32>
    %cst_64 = arith.constant 1.000000e+00 : f32
    %222 = vector.broadcast %cst_64 : f32 to vector<8x128xf32>
    %223 = arith.addf %222, %221 : vector<8x128xf32>
    %224 = arith.divf %222, %223 : vector<8x128xf32>
    %225 = vector.extract_strided_slice %207 {offsets = [0, 256], sizes = [8, 128], strides = [1, 1]} : vector<8x384xf32> to vector<8x128xf32>
    %226 = vector.extract_strided_slice %208 {offsets = [0, 256], sizes = [8, 128], strides = [1, 1]} : vector<8x384xf32> to vector<8x128xf32>
    %227 = arith.addf %226, %6 : vector<8x128xf32>
    %228 = arith.mulf %216, %227 : vector<8x128xf32>
    %229 = arith.addf %225, %228 : vector<8x128xf32>
    %230 = math.tanh %229 : vector<8x128xf32>
    %cst_65 = arith.constant 1.000000e+00 : f32
    %231 = vector.broadcast %cst_65 : f32 to vector<8x128xf32>
    %232 = arith.subf %231, %224 : vector<8x128xf32>
    %233 = arith.mulf %232, %230 : vector<8x128xf32>
    %234 = arith.mulf %224, %202 : vector<8x128xf32>
    %235 = arith.addf %233, %234 : vector<8x128xf32>
    %c0_66 = arith.constant 0 : index
    %c6_67 = arith.constant 6 : index
    %c0_68 = arith.constant 0 : index
    %236 = vector.load %arg7[%c0_66, %c6_67, %c0_68] : memref<8x8x128xf32, #tpu.memory_space<vmem>>, vector<8x1x128xf32>
    %237 = vector.shape_cast %236 : vector<8x1x128xf32> to vector<8x128xf32>
    %238 = vector.shape_cast %235 : vector<8x128xf32> to vector<8x1x128xf32>
    tpu.vector_store %arg7[%c0_66, %c6_67, %c0_68], %238 {strides = array<i32>} : memref<8x8x128xf32, #tpu.memory_space<vmem>>, vector<8x1x128xf32>,
    %c7 = arith.constant 7 : index
    %c0_69 = arith.constant 0 : index
    %c0_70 = arith.constant 0 : index
    %239 = vector.load %arg2[%c7, %c0_69, %c0_70] : memref<8x8x384xf32, #tpu.memory_space<vmem>>, vector<1x8x384xf32>
    %240 = vector.shape_cast %239 : vector<1x8x384xf32> to vector<8x384xf32>
    %cst_71 = arith.constant dense<0.000000e+00> : vector<8x384xf32>
    %241 = tpu.matmul %235, %3, %cst_71 {dimension_numbers = #tpu.dot_dimension_numbers<[1], [0], [0], [1], [0, 0, 1, 1], [], []>} : vector<8x128xf32>, vector<128x384xf32>, vector<8x384xf32> -> vector<8x384xf32>
    %242 = vector.extract_strided_slice %240 {offsets = [0, 0], sizes = [8, 128], strides = [1, 1]} : vector<8x384xf32> to vector<8x128xf32>
    %243 = vector.extract_strided_slice %241 {offsets = [0, 0], sizes = [8, 128], strides = [1, 1]} : vector<8x384xf32> to vector<8x128xf32>
    %244 = arith.addf %242, %243 : vector<8x128xf32>
    %245 = arith.negf %244 : vector<8x128xf32>
    %246 = math.exp %245 : vector<8x128xf32>
    %cst_72 = arith.constant 1.000000e+00 : f32
    %247 = vector.broadcast %cst_72 : f32 to vector<8x128xf32>
    %248 = arith.addf %247, %246 : vector<8x128xf32>
    %249 = arith.divf %247, %248 : vector<8x128xf32>
    %250 = vector.extract_strided_slice %240 {offsets = [0, 128], sizes = [8, 128], strides = [1, 1]} : vector<8x384xf32> to vector<8x128xf32>
    %251 = vector.extract_strided_slice %241 {offsets = [0, 128], sizes = [8, 128], strides = [1, 1]} : vector<8x384xf32> to vector<8x128xf32>
    %252 = arith.addf %250, %251 : vector<8x128xf32>
    %253 = arith.negf %252 : vector<8x128xf32>
    %254 = math.exp %253 : vector<8x128xf32>
    %cst_73 = arith.constant 1.000000e+00 : f32
    %255 = vector.broadcast %cst_73 : f32 to vector<8x128xf32>
    %256 = arith.addf %255, %254 : vector<8x128xf32>
    %257 = arith.divf %255, %256 : vector<8x128xf32>
    %258 = vector.extract_strided_slice %240 {offsets = [0, 256], sizes = [8, 128], strides = [1, 1]} : vector<8x384xf32> to vector<8x128xf32>
    %259 = vector.extract_strided_slice %241 {offsets = [0, 256], sizes = [8, 128], strides = [1, 1]} : vector<8x384xf32> to vector<8x128xf32>
    %260 = arith.addf %259, %6 : vector<8x128xf32>
    %261 = arith.mulf %249, %260 : vector<8x128xf32>
    %262 = arith.addf %258, %261 : vector<8x128xf32>
    %263 = math.tanh %262 : vector<8x128xf32>
    %cst_74 = arith.constant 1.000000e+00 : f32
    %264 = vector.broadcast %cst_74 : f32 to vector<8x128xf32>
    %265 = arith.subf %264, %257 : vector<8x128xf32>
    %266 = arith.mulf %265, %263 : vector<8x128xf32>
    %267 = arith.mulf %257, %235 : vector<8x128xf32>
    %268 = arith.addf %266, %267 : vector<8x128xf32>
    %c0_75 = arith.constant 0 : index
    %c7_76 = arith.constant 7 : index
    %c0_77 = arith.constant 0 : index
    %269 = vector.load %arg7[%c0_75, %c7_76, %c0_77] : memref<8x8x128xf32, #tpu.memory_space<vmem>>, vector<8x1x128xf32>
    %270 = vector.shape_cast %269 : vector<8x1x128xf32> to vector<8x128xf32>
    %271 = vector.shape_cast %268 : vector<8x128xf32> to vector<8x1x128xf32>
    tpu.vector_store %arg7[%c0_75, %c7_76, %c0_77], %271 {strides = array<i32>} : memref<8x8x128xf32, #tpu.memory_space<vmem>>, vector<8x1x128xf32>,
    %c0_78 = arith.constant 0 : index
    %c0_79 = arith.constant 0 : index
    %c0_80 = arith.constant 0 : index
    %272 = vector.load %arg7[%c0_78, %c0_79, %c0_80] : memref<8x8x128xf32, #tpu.memory_space<vmem>>, vector<8x8x128xf32>
    %c0_81 = arith.constant 0 : index
    %c0_82 = arith.constant 0 : index
    %c0_83 = arith.constant 0 : index
    %273 = vector.load %arg5[%c0_81, %c0_82, %c0_83] : memref<8x8x128xf32, #tpu.memory_space<vmem>>, vector<8x8x128xf32>
    tpu.vector_store %arg5[%c0_81, %c0_82, %c0_83], %272 {strides = array<i32>} : memref<8x8x128xf32, #tpu.memory_space<vmem>>, vector<8x8x128xf32>,
    %c0_84 = arith.constant 0 : index
    %c0_85 = arith.constant 0 : index
    %274 = vector.load %arg6[%c0_84, %c0_85] : memref<8x128xf32, #tpu.memory_space<vmem>>, vector<8x128xf32>
    tpu.vector_store %arg6[%c0_84, %c0_85], %268 {strides = array<i32>} : memref<8x128xf32, #tpu.memory_space<vmem>>, vector<8x128xf32>,
    return
  }
  func.func @transform_0(%arg0: i32, %arg1: i32) -> (i32, i32, i32) {
    %c0_i32 = arith.constant 0 : i32
    %c0_i32_0 = arith.constant 0 : i32
    return %arg1, %arg0, %c0_i32 : i32, i32, i32
  }
  func.func @transform_1(%arg0: i32, %arg1: i32) -> (i32, i32) {
    %c0_i32 = arith.constant 0 : i32
    %c0_i32_0 = arith.constant 0 : i32
    %c0_i32_1 = arith.constant 0 : i32
    return %c0_i32, %c0_i32_0 : i32, i32
  }
  func.func @transform_2(%arg0: i32, %arg1: i32) -> (i32, i32) {
    %c0_i32 = arith.constant 0 : i32
    %c0_i32_0 = arith.constant 0 : i32
    %c0_i32_1 = arith.constant 0 : i32
    return %c0_i32, %c0_i32_0 : i32, i32
  }
  func.func @transform_3(%arg0: i32, %arg1: i32) -> (i32, i32, i32) {
    %c0_i32 = arith.constant 0 : i32
    %c0_i32_0 = arith.constant 0 : i32
    return %arg0, %arg1, %c0_i32 : i32, i32, i32
  }
}

module attributes {stable_mosaic.version = 11 : i64} {
  func.func @fc_projection_kernel(%arg0: i32, %arg1: i32, %arg2: memref<32x128xf32, #tpu.memory_space<vmem>>, %arg3: memref<128x128xf32, #tpu.memory_space<vmem>>, %arg4: memref<1x128xf32, #tpu.memory_space<vmem>>, %arg5: memref<32x128xf32, #tpu.memory_space<vmem>>) attributes {dimension_semantics = [#tpu.dimension_semantics<parallel>, #tpu.dimension_semantics<parallel>], iteration_bounds = array<i64: 2, 1>, scalar_prefetch = 0 : i64, scratch_operands = 0 : i64, tpu.core_type = #tpu.core_type<tc>, window_params = [{transform_indices = @transform_0, window_bounds = array<i64: 32, 128>}, {transform_indices = @transform_1, window_bounds = array<i64: 128, 128>}, {transform_indices = @transform_2, window_bounds = array<i64: 1, 128>}, {transform_indices = @transform_3, window_bounds = array<i64: 32, 128>}]} {
    %c0 = arith.constant 0 : index
    %c0_0 = arith.constant 0 : index
    %0 = vector.load %arg2[%c0, %c0_0] : memref<32x128xf32, #tpu.memory_space<vmem>>, vector<32x128xf32>
    %c0_1 = arith.constant 0 : index
    %c0_2 = arith.constant 0 : index
    %1 = vector.load %arg3[%c0_1, %c0_2] : memref<128x128xf32, #tpu.memory_space<vmem>>, vector<128x128xf32>
    %cst = arith.constant dense<0.000000e+00> : vector<32x128xf32>
    %2 = tpu.matmul %0, %1, %cst {dimension_numbers = #tpu.dot_dimension_numbers<[1], [0], [0], [1], [0, 0, 1, 1], [], []>} : vector<32x128xf32>, vector<128x128xf32>, vector<32x128xf32> -> vector<32x128xf32>
    %c0_3 = arith.constant 0 : index
    %c0_4 = arith.constant 0 : index
    %3 = vector.load %arg4[%c0_3, %c0_4] : memref<1x128xf32, #tpu.memory_space<vmem>>, vector<1x128xf32>
    %4 = vector.broadcast %3 : vector<1x128xf32> to vector<32x128xf32>
    %5 = arith.addf %2, %4 : vector<32x128xf32>
    %c0_5 = arith.constant 0 : index
    %c0_6 = arith.constant 0 : index
    %6 = vector.load %arg5[%c0_5, %c0_6] : memref<32x128xf32, #tpu.memory_space<vmem>>, vector<32x128xf32>
    tpu.vector_store %arg5[%c0_5, %c0_6], %5 {strides = array<i32>} : memref<32x128xf32, #tpu.memory_space<vmem>>, vector<32x128xf32>,
    return
  }
  func.func @transform_0(%arg0: i32, %arg1: i32) -> (i32, i32) {
    %c0_i32 = arith.constant 0 : i32
    %c0_i32_0 = arith.constant 0 : i32
    return %arg0, %c0_i32 : i32, i32
  }
  func.func @transform_1(%arg0: i32, %arg1: i32) -> (i32, i32) {
    %c0_i32 = arith.constant 0 : i32
    %c0_i32_0 = arith.constant 0 : i32
    return %c0_i32, %arg1 : i32, i32
  }
  func.func @transform_2(%arg0: i32, %arg1: i32) -> (i32, i32) {
    %c0_i32 = arith.constant 0 : i32
    %c0_i32_0 = arith.constant 0 : i32
    return %c0_i32, %arg1 : i32, i32
  }
  func.func @transform_3(%arg0: i32, %arg1: i32) -> (i32, i32) {
    %c0_i32 = arith.constant 0 : i32
    return %arg0, %arg1 : i32, i32
  }
}

</mosaic_0001>

<llo_original>
// kernel: decoder_gru_forward.3
$region0: #{decoder_gru_forward.3}
  #allocation0 [shape = 'u32[]', space=smem, size = 0x4, offset = 0x4, fixed_abs, tag = 'smem constant byte address 0x4 - core index']
  #allocation1 [shape = 'u32[144,128]{1,0:T(1,128)}', space=vmem, size = 0x12000, scoped, tag = 'internal scratch']
  %s0 = inlined_call_operand.vmem [shape: f32[64,128], index: 0, kind: input, shape index: {}]
  %s1 = inlined_call_operand.vmem [shape: f32[128,128], index: 1, kind: input, shape index: {}]
  %s2 = inlined_call_operand.vmem [shape: f32[1,128], index: 2, kind: input, shape index: {}]
  %s3 = inlined_call_operand.vmem [shape: f32[64,128], index: 3, kind: output, shape index: {}]
  %s4 = sld [smem:[#allocation0]]
  $region45: #{decoder_gru_forward.3} parent=0
    _
  %s6 = ssub.s32 1, %s4
  %s7 = scalar_select 0, %s6, %s4
  loop: start=0, step=1, limit=4
  $region2: #{decoder_gru_forward.3} parent=0 // loop_pre_header
    _
  $region3: #{decoder_gru_forward.3} parent=0 // loop_header
    %s9 = sphi 0, %s13
    %p10 = scmp.ge.s32.totalorder %s9, 4
    %s16 = sphi 0, %s28
    %s17 = sphi 0, %s24
    %s18 = sphi 0, %s16
    %s19 = sphi 0, %s17
    %s20 = sphi 0, %s18
    %s21 = sphi 0, %s19
    %s31 = sphi 0, %s33
    %s34 = sphi 0, %s31
    %s35 = sphi 0, %s34
    %s51 = sphi 0, %s35
    %s57 = sphi 0, %s59
    %s60 = sphi 0, %s57
    %s61 = sphi 0, %s60
    %s77 = sphi 0, %s61
    %s83 = sphi 0, %s85
    %s86 = sphi 0, %s83
    %s87 = sphi 0, %s86
    %s103 = sphi 0, %s87
    %s111 = sphi 0, %s113
    %s114 = sphi 0, %s111
    %s115 = sphi 0, %s114
    %s131 = sphi 0, %s115
  $region4: #{decoder_gru_forward.3} parent=0 // loop_header_branch
    %12 = sbr.rel (%p10) target = $region8
  $region5: #{decoder_gru_forward.3} parent=0 // loop_body
    %s14 = ssub.s32 %s9, 1
    %s15 = ssub.s32 %s9, 2
    %s22 = sadd.s32 1, %s17
    %p23 = scmp.ge.s32.totalorder %s22, 1
    %s24 = scalar_select %p23, 0, %s22
    %s25 = sadd.s32 1, %s16
    %s26 = scalar_select %p23, %s25, %s16
    %p27 = scmp.ge.s32.totalorder %s26, 2
    %s28 = scalar_select %p27, 0, %s26
    %s29 = ssub.s32 %s16, %s28
    %p30 = scmp.eq.s32.totalorder %s29, 0
    %s32 = sadd.s32 %s31, 1
    %s33 = scalar_select %p30, %s31, %s32
    %p36 = pneg %p30
    %p37 = scmp.eq.s32.totalorder %s9, 1
    %p38 = por %p36, %p37
    %p39 = scmp.ne.s32.totalorder %s31, %s34
    %p40 = scmp.eq.s32.totalorder %s9, 0
    %p41 = por %p39, %p40
    %p42 = scmp.ne.s32.totalorder %s31, %s34
    %p43 = scmp.eq.s32.totalorder %s14, 1
    %p44 = por %p42, %p43
    %p45 = scmp.ne.s32.totalorder %s34, %s35
    %p46 = scmp.eq.s32.totalorder %s14, 0
    %p47 = por %p45, %p46
    %p48 = scmp.ne.s32.totalorder %s34, %s35
    %p49 = scmp.eq.s32.totalorder %s15, 1
    %p50 = por %p48, %p49
    %p52 = scmp.ne.s32.totalorder %s35, %s51
    %p53 = scmp.eq.s32.totalorder %s15, 0
    %p54 = por %p52, %p53
    %s55 = ssub.s32 %s17, %s24
    %p56 = scmp.eq.s32.totalorder %s55, 0
    %s58 = sadd.s32 %s57, 1
    %s59 = scalar_select %p56, %s57, %s58
    %p62 = pneg %p56
    %p63 = scmp.eq.s32.totalorder %s9, 1
    %p64 = por %p62, %p63
    %p65 = scmp.ne.s32.totalorder %s57, %s60
    %p66 = scmp.eq.s32.totalorder %s9, 0
    %p67 = por %p65, %p66
    %p68 = scmp.ne.s32.totalorder %s57, %s60
    %p69 = scmp.eq.s32.totalorder %s14, 1
    %p70 = por %p68, %p69
    %p71 = scmp.ne.s32.totalorder %s60, %s61
    %p72 = scmp.eq.s32.totalorder %s14, 0
    %p73 = por %p71, %p72
    %p74 = scmp.ne.s32.totalorder %s60, %s61
    %p75 = scmp.eq.s32.totalorder %s15, 1
    %p76 = por %p74, %p75
    %p78 = scmp.ne.s32.totalorder %s61, %s77
    %p79 = scmp.eq.s32.totalorder %s15, 0
    %p80 = por %p78, %p79
    %s81 = ssub.s32 %s17, %s24
    %p82 = scmp.eq.s32.totalorder %s81, 0
    %s84 = sadd.s32 %s83, 1
    %s85 = scalar_select %p82, %s83, %s84
    %p88 = pneg %p82
    %p89 = scmp.eq.s32.totalorder %s9, 1
    %p90 = por %p88, %p89
    %p91 = scmp.ne.s32.totalorder %s83, %s86
    %p92 = scmp.eq.s32.totalorder %s9, 0
    %p93 = por %p91, %p92
    %p94 = scmp.ne.s32.totalorder %s83, %s86
    %p95 = scmp.eq.s32.totalorder %s14, 1
    %p96 = por %p94, %p95
    %p97 = scmp.ne.s32.totalorder %s86, %s87
    %p98 = scmp.eq.s32.totalorder %s14, 0
    %p99 = por %p97, %p98
    %p100 = scmp.ne.s32.totalorder %s86, %s87
    %p101 = scmp.eq.s32.totalorder %s15, 1
    %p102 = por %p100, %p101
    %p104 = scmp.ne.s32.totalorder %s87, %s103
    %p105 = scmp.eq.s32.totalorder %s15, 0
    %p106 = por %p104, %p105
    %s107 = ssub.s32 %s16, %s28
    %s108 = ssub.s32 %s17, %s24
    %s109 = sor.u32 %s107, %s108
    %p110 = scmp.eq.s32.totalorder %s109, 0
    %s112 = sadd.s32 %s111, 1
    %s113 = scalar_select %p110, %s111, %s112
    %p116 = pneg %p110
    %p117 = scmp.eq.s32.totalorder %s9, 1
    %p118 = por %p116, %p117
    %p119 = scmp.ne.s32.totalorder %s111, %s114
    %p120 = scmp.eq.s32.totalorder %s9, 0
    %p121 = por %p119, %p120
    %p122 = scmp.ne.s32.totalorder %s111, %s114
    %p123 = scmp.eq.s32.totalorder %s14, 1
    %p124 = por %p122, %p123
    %p125 = scmp.ne.s32.totalorder %s114, %s115
    %p126 = scmp.eq.s32.totalorder %s14, 0
    %p127 = por %p125, %p126
    %p128 = scmp.ne.s32.totalorder %s114, %s115
    %p129 = scmp.eq.s32.totalorder %s15, 1
    %p130 = por %p128, %p129
    %p132 = scmp.ne.s32.totalorder %s115, %s131
    %p133 = scmp.eq.s32.totalorder %s15, 0
    %p134 = por %p132, %p133
    %p135 = scmp.le.s32.totalorder 1, %s9
    %p136 = scmp.lt.s32.totalorder %s9, 3
    %p137 = pnand %p135, %p136
    %p138 = pneg %p137
    // Predicated region
    $region9: #{decoder_gru_forward.3} parent=5 // pred_check
      _
    $region10: #{decoder_gru_forward.3} parent=5 // pred_check_branch
      %140 = sbr.rel (%p137) target = $region12
    $region11: #{decoder_gru_forward.3} parent=5 // pred_region
      %s141 = ssub.s32 %s9, 1
      // Predicated region
      $region13: #{decoder_gru_forward.3} parent=11 // pred_check
        %p142 = pneg %p73
      $region14: #{decoder_gru_forward.3} parent=11 // pred_check_branch
        %144 = sbr.rel (%p142) target = $region16
      $region15: #{decoder_gru_forward.3} parent=11 // pred_region
        %p145 = scmp.lt.s32.totalorder %s19, 0
        %s146 = scalar_select %p145, %s19, 0
        %s147 = smul.addr %s146, 8
        %s148 = scalar_lea.vmem %s1, %s147
      $region16: #{decoder_gru_forward.3} parent=11 // pred_fallthru
        _
      // Predicated region
      $region17: #{decoder_gru_forward.3} parent=11 // pred_check
        %p149 = pneg %p99
      $region18: #{decoder_gru_forward.3} parent=11 // pred_check_branch
        %151 = sbr.rel (%p149) target = $region20
      $region19: #{decoder_gru_forward.3} parent=11 // pred_region
        %p152 = scmp.lt.s32.totalorder %s19, 0
        %s153 = scalar_select %p152, %s19, 0
        %s154 = scalar_lea.vmem %s2, %s153
      $region20: #{decoder_gru_forward.3} parent=11 // pred_fallthru
        _
    $region12: #{decoder_gru_forward.3} parent=5 // pred_fallthru
      _
    %p155 = scmp.lt.s32.totalorder %s9, 2
    // Predicated region
    $region21: #{decoder_gru_forward.3} parent=5 // pred_check
      %p156 = pneg %p155
    $region22: #{decoder_gru_forward.3} parent=5 // pred_check_branch
      %158 = sbr.rel (%p156) target = $region24
    $region23: #{decoder_gru_forward.3} parent=5 // pred_region
      // Predicated region
      $region25: #{decoder_gru_forward.3} parent=23 // pred_check
        %p159 = pneg %p41
      $region26: #{decoder_gru_forward.3} parent=23 // pred_check_branch
        %161 = sbr.rel (%p159) target = $region28
      $region27: #{decoder_gru_forward.3} parent=23 // pred_region
        %s162 = smul.u32 4, %s16
        %p163 = scmp.lt.s32.totalorder %s162, 7
        %s164 = scalar_select %p163, %s162, 7
        %s165 = smul.addr %s164, 8
        %s166 = scalar_lea.vmem %s0, %s165
        %s167 = smul.u32 4, %s16
      $region28: #{decoder_gru_forward.3} parent=23 // pred_fallthru
        _
    $region24: #{decoder_gru_forward.3} parent=5 // pred_fallthru
      _
    %p168 = scmp.le.s32.totalorder 1, %s9
    %p169 = scmp.lt.s32.totalorder %s9, 3
    %p170 = pnand %p168, %p169
    %p171 = pneg %p170
    // Predicated region
    $region29: #{decoder_gru_forward.3} parent=5 // pred_check
      _
    $region30: #{decoder_gru_forward.3} parent=5 // pred_check_branch
      %173 = sbr.rel (%p170) target = $region32
    $region31: #{decoder_gru_forward.3} parent=5 // pred_region
      %s174 = ssub.s32 %s9, 1
      %s175 = smul.u32 4, %s18
      %p176 = scmp.lt.s32.totalorder %s175, 7
      %s177 = scalar_select %p176, %s175, 7
      %s178 = smul.addr %s177, 8
      %s179 = scalar_lea.vmem %s0, %s178
      %p180 = pneg %p47
      %p181 = pneg %p44
      %p182 = scmp.lt.s32.totalorder %s19, 0
      %s183 = scalar_select %p182, %s19, 0
      %s184 = smul.addr %s183, 8
      %s185 = scalar_lea.vmem %s1, %s184
      %p186 = pneg %p73
      %p187 = pneg %p70
      %p188 = scmp.lt.s32.totalorder %s19, 0
      %s189 = scalar_select %p188, %s19, 0
      %s190 = scalar_lea.vmem %s2, %s189
      %p191 = pneg %p99
      %p192 = pneg %p96
      %p193 = pneg %p127
      %p194 = pneg %p124
      %s195 = smul.u32 4, %s18
      %p196 = scmp.lt.s32.totalorder %s195, 7
      %s197 = scalar_select %p196, %s195, 7
      %p198 = scmp.lt.s32.totalorder %s19, 0
      %s199 = scalar_select %p198, %s19, 0
      %s200 = sadd.s32 %s199, %s197
      %s201 = smul.addr %s200, 8
      %s202 = scalar_lea.vmem %s3, %s201
      %s203 = smul.u32 4, %s18
      %p204 = scmp.lt.s32.totalorder %s203, 7
      %s205 = scalar_select %p204, %s203, 7
      %s206 = smul.addr %s205, 8
      %s207 = scalar_lea.vmem %s0, %s206
      %s208 = smul.u32 4, %s18
      %p209 = scmp.lt.s32.totalorder %s19, 0
      %s210 = scalar_select %p209, %s19, 0
      %s211 = smul.addr %s210, 8
      %s212 = scalar_lea.vmem %s1, %s211
      %p213 = scmp.lt.s32.totalorder %s19, 0
      %s214 = scalar_select %p213, %s19, 0
      %s215 = scalar_lea.vmem %s2, %s214
      %s216 = smul.u32 4, %s18
      %p217 = scmp.lt.s32.totalorder %s216, 7
      %s218 = scalar_select %p217, %s216, 7
      %p219 = scmp.lt.s32.totalorder %s19, 0
      %s220 = scalar_select %p219, %s19, 0
      %s221 = sadd.s32 %s220, %s218
      %s222 = smul.addr %s221, 8
      %s223 = scalar_lea.vmem %s3, %s222
      %s224 = smul.u32 4, %s18
      %v225 = vld [vmem:[%s207] sm:$0xff]
      %v226 = vld [vmem:[%s207 + $0x8] sm:$0xff]
      %v227 = vld [vmem:[%s207 + $0x10] sm:$0xff]
      %v228 = vld [vmem:[%s207 + $0x18] sm:$0xff]
      %v229 = vld [vmem:[%s212] sm:$0xff]
      %v230 = vld [vmem:[%s212 + $0x8] sm:$0xff]
      %v231 = vld [vmem:[%s212 + $0x10] sm:$0xff]
      %v232 = vld [vmem:[%s212 + $0x18] sm:$0xff]
      %v233 = vld [vmem:[%s212 + $0x20] sm:$0xff]
      %v234 = vld [vmem:[%s212 + $0x28] sm:$0xff]
      %v235 = vld [vmem:[%s212 + $0x30] sm:$0xff]
      %v236 = vld [vmem:[%s212 + $0x38] sm:$0xff]
      %v237 = vld [vmem:[%s212 + $0x40] sm:$0xff]
      %v238 = vld [vmem:[%s212 + $0x48] sm:$0xff]
      %v239 = vld [vmem:[%s212 + $0x50] sm:$0xff]
      %v240 = vld [vmem:[%s212 + $0x58] sm:$0xff]
      %v241 = vld [vmem:[%s212 + $0x60] sm:$0xff]
      %v242 = vld [vmem:[%s212 + $0x68] sm:$0xff]
      %v243 = vld [vmem:[%s212 + $0x70] sm:$0xff]
      %v244 = vld [vmem:[%s212 + $0x78] sm:$0xff]
      %v245 = vld [vmem:[%s215] sm:$0x1]
      %v247 = vlaneseq
      %v248 = vshrl.u32 %v247, 7
      %v249 = vsub.s32 0, %v248
      %v250 = vrot.slane %v245, %v249
      %252 = vmatprep.subr.mxu0 0.0
      %253 = vmatpush1.msra.mxu0 %v229
      %254 = vmatprep.subr.mxu0 0.0
      %255 = vmatpush1.msra.mxu0 %v230
      %256 = vmatprep.subr.mxu0 0.0
      %257 = vmatpush1.msra.mxu0 %v231
      %258 = vmatprep.subr.mxu0 0.0
      %259 = vmatpush1.msra.mxu0 %v232
      %260 = vmatprep.subr.mxu0 0.0
      %261 = vmatpush1.msra.mxu0 %v233
      %262 = vmatprep.subr.mxu0 0.0
      %263 = vmatpush1.msra.mxu0 %v234
      %264 = vmatprep.subr.mxu0 0.0
      %265 = vmatpush1.msra.mxu0 %v235
      %266 = vmatprep.subr.mxu0 0.0
      %267 = vmatpush1.msra.mxu0 %v236
      %268 = vmatprep.subr.mxu0 0.0
      %269 = vmatpush1.msra.mxu0 %v237
      %270 = vmatprep.subr.mxu0 0.0
      %271 = vmatpush1.msra.mxu0 %v238
      %272 = vmatprep.subr.mxu0 0.0
      %273 = vmatpush1.msra.mxu0 %v239
      %274 = vmatprep.subr.mxu0 0.0
      %275 = vmatpush1.msra.mxu0 %v240
      %276 = vmatprep.subr.mxu0 0.0
      %277 = vmatpush1.msra.mxu0 %v241
      %278 = vmatprep.subr.mxu0 0.0
      %279 = vmatpush1.msra.mxu0 %v242
      %280 = vmatprep.subr.mxu0 0.0
      %281 = vmatpush1.msra.mxu0 %v243
      %282 = vmatprep.subr.mxu0 0.0
      %283 = vmatpush1.msra.mxu0 %v244
      %284 = vmatprep.subr.mxu0 0.0
      %285 = vmatpush1.msra.mxu0 0.0
      %286 = vmatprep.subr.mxu0 0.0
      %287 = vmatpush1.msra.mxu0 0.0
      %288 = vmatprep.subr.mxu0 0.0
      %289 = vmatpush1.msra.mxu0 0.0
      %290 = vmatprep.subr.mxu0 0.0
      %291 = vmatpush1.msra.mxu0 0.0
      %292 = vmatprep.subr.mxu0 0.0
      %293 = vmatpush1.msra.mxu0 0.0
      %294 = vmatprep.subr.mxu0 0.0
      %295 = vmatpush1.msra.mxu0 0.0
      %296 = vmatprep.subr.mxu0 0.0
      %297 = vmatpush1.msra.mxu0 0.0
      %298 = vmatprep.subr.mxu0 0.0
      %299 = vmatpush1.msra.mxu0 0.0
      %300 = vmatprep.subr.mxu0 0.0
      %301 = vmatpush1.msra.mxu0 0.0
      %302 = vmatprep.subr.mxu0 0.0
      %303 = vmatpush1.msra.mxu0 0.0
      %304 = vmatprep.subr.mxu0 0.0
      %305 = vmatpush1.msra.mxu0 0.0
      %306 = vmatprep.subr.mxu0 0.0
      %307 = vmatpush1.msra.mxu0 0.0
      %308 = vmatprep.subr.mxu0 0.0
      %309 = vmatpush1.msra.mxu0 0.0
      %310 = vmatprep.subr.mxu0 0.0
      %311 = vmatpush1.msra.mxu0 0.0
      %312 = vmatprep.subr.mxu0 0.0
      %313 = vmatpush1.msra.mxu0 0.0
      %314 = vmatprep.subr.mxu0 0.0
      %315 = vmatpush1.msra.mxu0 0.0
      %316 = vmatprep.mubr.f32.mxu0 0.0
      %317 = vmatmul.mubr.f32.gmra.mrb[0].mxu0 %v225
      %v318 = vpop.f32.mrb[0].mxu0
      %v319 = vadd.f32 %v250, %v318
      %v320 = vpop.f32.mrb[0].mxu0
      %321 = vmatprep.mubr.f32.mxu0 0.0
      %322 = vmatmul.mubr.f32.gmra.mrb[0].mxu0 %v226
      %v323 = vpop.f32.mrb[0].mxu0
      %v324 = vadd.f32 %v250, %v323
      %v325 = vpop.f32.mrb[0].mxu0
      %326 = vmatprep.mubr.f32.mxu0 0.0
      %327 = vmatmul.mubr.f32.gmra.mrb[0].mxu0 %v227
      %v328 = vpop.f32.mrb[0].mxu0
      %v329 = vadd.f32 %v250, %v328
      %v330 = vpop.f32.mrb[0].mxu0
      %331 = vmatprep.mubr.f32.mxu0 0.0
      %332 = vmatmul.mubr.f32.gmra.mrb[0].mxu0 %v228
      %v333 = vpop.f32.mrb[0].mxu0
      %v334 = vadd.f32 %v250, %v333
      %v335 = vpop.f32.mrb[0].mxu0
      %336 = vdwg.mxu0
      %337 = vst [vmem:[%s223] sm:$0xff] %v319
      %338 = vst [vmem:[%s223 + $0x8] sm:$0xff] %v324
      %339 = vst [vmem:[%s223 + $0x10] sm:$0xff] %v329
      %340 = vst [vmem:[%s223 + $0x18] sm:$0xff] %v334
      %s341 = smul.u32 4, %s18
      %p342 = scmp.lt.s32.totalorder %s341, 7
      %s343 = scalar_select %p342, %s341, 7
      %p344 = scmp.lt.s32.totalorder %s19, 0
      %s345 = scalar_select %p344, %s19, 0
      %s346 = sadd.s32 %s345, %s343
      %s347 = smul.addr %s346, 8
      %s348 = scalar_lea.vmem %s3, %s347
      // Predicated region
      $region33: #{decoder_gru_forward.3} parent=31 // pred_check
        %p349 = pneg %p124
      $region34: #{decoder_gru_forward.3} parent=31 // pred_check_branch
        %351 = sbr.rel (%p349) target = $region36
      $region35: #{decoder_gru_forward.3} parent=31 // pred_region
        %s352 = smul.u32 4, %s18
      $region36: #{decoder_gru_forward.3} parent=31 // pred_fallthru
        _
    $region32: #{decoder_gru_forward.3} parent=5 // pred_fallthru
      _
    %p353 = scmp.le.s32.totalorder 2, %s9
    // Predicated region
    $region37: #{decoder_gru_forward.3} parent=5 // pred_check
      %p354 = pneg %p353
    $region38: #{decoder_gru_forward.3} parent=5 // pred_check_branch
      %356 = sbr.rel (%p354) target = $region40
    $region39: #{decoder_gru_forward.3} parent=5 // pred_region
      %s357 = ssub.s32 %s9, 2
      // Predicated region
      $region41: #{decoder_gru_forward.3} parent=39 // pred_check
        %p358 = pneg %p130
      $region42: #{decoder_gru_forward.3} parent=39 // pred_check_branch
        %360 = sbr.rel (%p358) target = $region44
      $region43: #{decoder_gru_forward.3} parent=39 // pred_region
        %s361 = smul.u32 4, %s20
        %p362 = scmp.lt.s32.totalorder %s361, 7
        %s363 = scalar_select %p362, %s361, 7
        %p364 = scmp.lt.s32.totalorder %s21, 0
        %s365 = scalar_select %p364, %s21, 0
        %s366 = sadd.s32 %s365, %s363
        %s367 = smul.addr %s366, 8
        %s368 = scalar_lea.vmem %s3, %s367
      $region44: #{decoder_gru_forward.3} parent=39 // pred_fallthru
        _
    $region40: #{decoder_gru_forward.3} parent=5 // pred_fallthru
      _
  $region6: #{decoder_gru_forward.3} parent=0 // loop_footer
    %s13 = sadd.s32 1, %s9
  $region7: #{decoder_gru_forward.3} parent=0 // loop_footer_branch
    %8 = sbr.rel target = $region3
  $region8: #{decoder_gru_forward.3} parent=0 // loop_exit
    _

// kernel: decoder_gru_forward.2
$region0: #{decoder_gru_forward.2}
  #allocation0 [shape = 'u32[]', space=smem, size = 0x4, offset = 0x4, fixed_abs, tag = 'smem constant byte address 0x4 - core index']
  #allocation1 [shape = 'u32[144,128]{1,0:T(1,128)}', space=vmem, size = 0x12000, scoped, tag = 'internal scratch']
  #allocation2 [shape = 'f32[8,128]{1,0:T(8,128)}', space=vmem, size = 0x1000, scoped, tag = 'scratch operand']
  #allocation3 [shape = 'f32[8,8,128]{2,1,0:T(8,128)}', space=vmem, size = 0x8000, scoped, tag = 'scratch operand']
  %s0 = inlined_call_operand.vmem [shape: f32[8,8,384], index: 0, kind: input, shape index: {}]
  %s1 = inlined_call_operand.vmem [shape: f32[128,384], index: 1, kind: input, shape index: {}]
  %s2 = inlined_call_operand.vmem [shape: f32[1,128], index: 2, kind: input, shape index: {}]
  %s3 = inlined_call_operand.vmem [shape: f32[8,8,128], index: 3, kind: output, shape index: {}]
  %s4 = sld [smem:[#allocation0]]
  $region26: #{decoder_gru_forward.2} parent=0
    _
  %s6 = ssub.s32 1, %s4
  %s7 = scalar_select 0, %s6, %s4
  // Predicated region
  $region2: #{decoder_gru_forward.2} parent=0 // pred_check
    _
  $region3: #{decoder_gru_forward.2} parent=0 // pred_check_branch
    %9 = sbr.rel (0) target = $region5
  $region4: #{decoder_gru_forward.2} parent=0 // pred_region
    _
  $region5: #{decoder_gru_forward.2} parent=0 // pred_fallthru
    _
  // Predicated region
  $region6: #{decoder_gru_forward.2} parent=0 // pred_check
    _
  $region7: #{decoder_gru_forward.2} parent=0 // pred_check_branch
    %11 = sbr.rel (0) target = $region9
  $region8: #{decoder_gru_forward.2} parent=0 // pred_region
    _
  $region9: #{decoder_gru_forward.2} parent=0 // pred_fallthru
    _
  // Predicated region
  $region10: #{decoder_gru_forward.2} parent=0 // pred_check
    _
  $region11: #{decoder_gru_forward.2} parent=0 // pred_check_branch
    %13 = sbr.rel (0) target = $region13
  $region12: #{decoder_gru_forward.2} parent=0 // pred_region
    _
  $region13: #{decoder_gru_forward.2} parent=0 // pred_fallthru
    _
  %p14 = scmp.eq.s32.totalorder 0, 0
  // Predicated region
  $region14: #{decoder_gru_forward.2} parent=0 // pred_check
    %p15 = pneg %p14
  $region15: #{decoder_gru_forward.2} parent=0 // pred_check_branch
    %17 = sbr.rel (%p15) target = $region17
  $region16: #{decoder_gru_forward.2} parent=0 // pred_region
    %18 = vst [vmem:[#allocation2] sm:$0xff] 0.0
  $region17: #{decoder_gru_forward.2} parent=0 // pred_fallthru
    _
  %v19 = vld [vmem:[%s1] sm:$0xff]
  %v20 = vld [vmem:[%s1 + $0x8] sm:$0xff]
  %v21 = vld [vmem:[%s1 + $0x10] sm:$0xff]
  %v22 = vld [vmem:[%s1 + $0x18] sm:$0xff]
  %v23 = vld [vmem:[%s1 + $0x20] sm:$0xff]
  %v24 = vld [vmem:[%s1 + $0x28] sm:$0xff]
  %v25 = vld [vmem:[%s1 + $0x30] sm:$0xff]
  %v26 = vld [vmem:[%s1 + $0x38] sm:$0xff]
  %v27 = vld [vmem:[%s1 + $0x40] sm:$0xff]
  %v28 = vld [vmem:[%s1 + $0x48] sm:$0xff]
  %v29 = vld [vmem:[%s1 + $0x50] sm:$0xff]
  %v30 = vld [vmem:[%s1 + $0x58] sm:$0xff]
  %v31 = vld [vmem:[%s1 + $0x60] sm:$0xff]
  %v32 = vld [vmem:[%s1 + $0x68] sm:$0xff]
  %v33 = vld [vmem:[%s1 + $0x70] sm:$0xff]
  %v34 = vld [vmem:[%s1 + $0x78] sm:$0xff]
  %v35 = vld [vmem:[%s1 + $0x80] sm:$0xff]
  %v36 = vld [vmem:[%s1 + $0x88] sm:$0xff]
  %v37 = vld [vmem:[%s1 + $0x90] sm:$0xff]
  %v38 = vld [vmem:[%s1 + $0x98] sm:$0xff]
  %v39 = vld [vmem:[%s1 + $0xa0] sm:$0xff]
  %v40 = vld [vmem:[%s1 + $0xa8] sm:$0xff]
  %v41 = vld [vmem:[%s1 + $0xb0] sm:$0xff]
  %v42 = vld [vmem:[%s1 + $0xb8] sm:$0xff]
  %v43 = vld [vmem:[%s1 + $0xc0] sm:$0xff]
  %v44 = vld [vmem:[%s1 + $0xc8] sm:$0xff]
  %v45 = vld [vmem:[%s1 + $0xd0] sm:$0xff]
  %v46 = vld [vmem:[%s1 + $0xd8] sm:$0xff]
  %v47 = vld [vmem:[%s1 + $0xe0] sm:$0xff]
  %v48 = vld [vmem:[%s1 + $0xe8] sm:$0xff]
  %v49 = vld [vmem:[%s1 + $0xf0] sm:$0xff]
  %v50 = vld [vmem:[%s1 + $0xf8] sm:$0xff]
  %v51 = vld [vmem:[%s1 + $0x100] sm:$0xff]
  %v52 = vld [vmem:[%s1 + $0x108] sm:$0xff]
  %v53 = vld [vmem:[%s1 + $0x110] sm:$0xff]
  %v54 = vld [vmem:[%s1 + $0x118] sm:$0xff]
  %v55 = vld [vmem:[%s1 + $0x120] sm:$0xff]
  %v56 = vld [vmem:[%s1 + $0x128] sm:$0xff]
  %v57 = vld [vmem:[%s1 + $0x130] sm:$0xff]
  %v58 = vld [vmem:[%s1 + $0x138] sm:$0xff]
  %v59 = vld [vmem:[%s1 + $0x140] sm:$0xff]
  %v60 = vld [vmem:[%s1 + $0x148] sm:$0xff]
  %v61 = vld [vmem:[%s1 + $0x150] sm:$0xff]
  %v62 = vld [vmem:[%s1 + $0x158] sm:$0xff]
  %v63 = vld [vmem:[%s1 + $0x160] sm:$0xff]
  %v64 = vld [vmem:[%s1 + $0x168] sm:$0xff]
  %v65 = vld [vmem:[%s1 + $0x170] sm:$0xff]
  %v66 = vld [vmem:[%s1 + $0x178] sm:$0xff]
  %v67 = vld [vmem:[%s2] sm:$0x1]
  %v69 = vlaneseq
  %v70 = vshrl.u32 %v69, 7
  %v71 = vsub.s32 0, %v70
  %v72 = vrot.slane %v67, %v71
  %v74 = vld [vmem:[#allocation2] sm:$0xff]
  %v75 = vld [vmem:[%s0] sm:$0xff]
  %v76 = vld [vmem:[%s0 + $0x8] sm:$0xff]
  %v77 = vld [vmem:[%s0 + $0x10] sm:$0xff]
  %78 = vmatprep.subr.mxu0 %v20
  %79 = vmatpush1.msra.mxu0 %v19
  %80 = vmatprep.subr.mxu0 %v23
  %81 = vmatpush1.msra.mxu0 %v22
  %82 = vmatprep.subr.mxu0 %v26
  %83 = vmatpush1.msra.mxu0 %v25
  %84 = vmatprep.subr.mxu0 %v29
  %85 = vmatpush1.msra.mxu0 %v28
  %86 = vmatprep.subr.mxu0 %v32
  %87 = vmatpush1.msra.mxu0 %v31
  %88 = vmatprep.subr.mxu0 %v35
  %89 = vmatpush1.msra.mxu0 %v34
  %90 = vmatprep.subr.mxu0 %v38
  %91 = vmatpush1.msra.mxu0 %v37
  %92 = vmatprep.subr.mxu0 %v41
  %93 = vmatpush1.msra.mxu0 %v40
  %94 = vmatprep.subr.mxu0 %v44
  %95 = vmatpush1.msra.mxu0 %v43
  %96 = vmatprep.subr.mxu0 %v47
  %97 = vmatpush1.msra.mxu0 %v46
  %98 = vmatprep.subr.mxu0 %v50
  %99 = vmatpush1.msra.mxu0 %v49
  %100 = vmatprep.subr.mxu0 %v53
  %101 = vmatpush1.msra.mxu0 %v52
  %102 = vmatprep.subr.mxu0 %v56
  %103 = vmatpush1.msra.mxu0 %v55
  %104 = vmatprep.subr.mxu0 %v59
  %105 = vmatpush1.msra.mxu0 %v58
  %106 = vmatprep.subr.mxu0 %v62
  %107 = vmatpush1.msra.mxu0 %v61
  %108 = vmatprep.subr.mxu0 %v65
  %109 = vmatpush1.msra.mxu0 %v64
  %110 = vmatprep.subr.mxu0 0.0
  %111 = vmatpush1.msra.mxu0 0.0
  %112 = vmatprep.subr.mxu0 0.0
  %113 = vmatpush1.msra.mxu0 0.0
  %114 = vmatprep.subr.mxu0 0.0
  %115 = vmatpush1.msra.mxu0 0.0
  %116 = vmatprep.subr.mxu0 0.0
  %117 = vmatpush1.msra.mxu0 0.0
  %118 = vmatprep.subr.mxu0 0.0
  %119 = vmatpush1.msra.mxu0 0.0
  %120 = vmatprep.subr.mxu0 0.0
  %121 = vmatpush1.msra.mxu0 0.0
  %122 = vmatprep.subr.mxu0 0.0
  %123 = vmatpush1.msra.mxu0 0.0
  %124 = vmatprep.subr.mxu0 0.0
  %125 = vmatpush1.msra.mxu0 0.0
  %126 = vmatprep.subr.mxu0 0.0
  %127 = vmatpush1.msra.mxu0 0.0
  %128 = vmatprep.subr.mxu0 0.0
  %129 = vmatpush1.msra.mxu0 0.0
  %130 = vmatprep.subr.mxu0 0.0
  %131 = vmatpush1.msra.mxu0 0.0
  %132 = vmatprep.subr.mxu0 0.0
  %133 = vmatpush1.msra.mxu0 0.0
  %134 = vmatprep.subr.mxu0 0.0
  %135 = vmatpush1.msra.mxu0 0.0
  %136 = vmatprep.subr.mxu0 0.0
  %137 = vmatpush1.msra.mxu0 0.0
  %138 = vmatprep.subr.mxu0 0.0
  %139 = vmatpush1.msra.mxu0 0.0
  %140 = vmatprep.subr.mxu0 0.0
  %141 = vmatpush1.msra.mxu0 0.0
  %142 = vmatprep.mubr.f32.mxu0 0.0
  %143 = vmatmul.mubr.f32.gmra.mrb[0].mxu0 %v74
  %v144 = vpop.f32.mrb[0].mxu0
  %v145 = vadd.f32 0.0, %v144
  %v146 = vpop.f32.mrb[0].mxu0
  %v147 = vadd.f32 0.0, %v146
  %148 = vdwg.mxu0
  %149 = vmatprep.subr.mxu0 0.0
  %150 = vmatpush1.msra.mxu0 %v21
  %151 = vmatprep.subr.mxu0 0.0
  %152 = vmatpush1.msra.mxu0 %v24
  %153 = vmatprep.subr.mxu0 0.0
  %154 = vmatpush1.msra.mxu0 %v27
  %155 = vmatprep.subr.mxu0 0.0
  %156 = vmatpush1.msra.mxu0 %v30
  %157 = vmatprep.subr.mxu0 0.0
  %158 = vmatpush1.msra.mxu0 %v33
  %159 = vmatprep.subr.mxu0 0.0
  %160 = vmatpush1.msra.mxu0 %v36
  %161 = vmatprep.subr.mxu0 0.0
  %162 = vmatpush1.msra.mxu0 %v39
  %163 = vmatprep.subr.mxu0 0.0
  %164 = vmatpush1.msra.mxu0 %v42
  %165 = vmatprep.subr.mxu0 0.0
  %166 = vmatpush1.msra.mxu0 %v45
  %167 = vmatprep.subr.mxu0 0.0
  %168 = vmatpush1.msra.mxu0 %v48
  %169 = vmatprep.subr.mxu0 0.0
  %170 = vmatpush1.msra.mxu0 %v51
  %171 = vmatprep.subr.mxu0 0.0
  %172 = vmatpush1.msra.mxu0 %v54
  %173 = vmatprep.subr.mxu0 0.0
  %174 = vmatpush1.msra.mxu0 %v57
  %175 = vmatprep.subr.mxu0 0.0
  %176 = vmatpush1.msra.mxu0 %v60
  %177 = vmatprep.subr.mxu0 0.0
  %178 = vmatpush1.msra.mxu0 %v63
  %179 = vmatprep.subr.mxu0 0.0
  %180 = vmatpush1.msra.mxu0 %v66
  %181 = vmatprep.subr.mxu0 0.0
  %182 = vmatpush1.msra.mxu0 0.0
  %183 = vmatprep.subr.mxu0 0.0
  %184 = vmatpush1.msra.mxu0 0.0
  %185 = vmatprep.subr.mxu0 0.0
  %186 = vmatpush1.msra.mxu0 0.0
  %187 = vmatprep.subr.mxu0 0.0
  %188 = vmatpush1.msra.mxu0 0.0
  %189 = vmatprep.subr.mxu0 0.0
  %190 = vmatpush1.msra.mxu0 0.0
  %191 = vmatprep.subr.mxu0 0.0
  %192 = vmatpush1.msra.mxu0 0.0
  %193 = vmatprep.subr.mxu0 0.0
  %194 = vmatpush1.msra.mxu0 0.0
  %195 = vmatprep.subr.mxu0 0.0
  %196 = vmatpush1.msra.mxu0 0.0
  %197 = vmatprep.subr.mxu0 0.0
  %198 = vmatpush1.msra.mxu0 0.0
  %199 = vmatprep.subr.mxu0 0.0
  %200 = vmatpush1.msra.mxu0 0.0
  %201 = vmatprep.subr.mxu0 0.0
  %202 = vmatpush1.msra.mxu0 0.0
  %203 = vmatprep.subr.mxu0 0.0
  %204 = vmatpush1.msra.mxu0 0.0
  %205 = vmatprep.subr.mxu0 0.0
  %206 = vmatpush1.msra.mxu0 0.0
  %207 = vmatprep.subr.mxu0 0.0
  %208 = vmatpush1.msra.mxu0 0.0
  %209 = vmatprep.subr.mxu0 0.0
  %210 = vmatpush1.msra.mxu0 0.0
  %211 = vmatprep.subr.mxu0 0.0
  %212 = vmatpush1.msra.mxu0 0.0
  %213 = vmatprep.mubr.f32.mxu0 0.0
  %214 = vmatmul.mubr.f32.gmra.mrb[0].mxu0 %v74
  %v215 = vpop.f32.mrb[0].mxu0
  %v216 = vadd.f32 0.0, %v215
  %v217 = vpop.f32.mrb[0].mxu0
  %218 = vdwg.mxu0
  %v219 = vadd.f32 %v75, %v145
  %v220 = vxor.u32 %v219, 2147483648
  %v221 = vmul.f32 %v220, 1.442695
  %v222 = vpow.pop %v221
  %v223 = vadd.f32 %v222, 1.0
  %v224 = vrcp.pop %v223
  %v225 = vmul.f32 1.0, %v224
  %v226 = vadd.f32 %v76, %v147
  %v227 = vxor.u32 %v226, 2147483648
  %v228 = vmul.f32 %v227, 1.442695
  %v229 = vpow.pop %v228
  %v230 = vadd.f32 %v229, 1.0
  %v231 = vrcp.pop %v230
  %v232 = vmul.f32 1.0, %v231
  %v233 = vadd.f32 %v216, %v72
  %v234 = vmul.f32 %v225, %v233
  %v235 = vadd.f32 %v77, %v234
  %v236 = vtanh.pop %v235
  %v237 = vsub.f32 1.0, %v232
  %v238 = vmul.f32 %v237, %v236
  %v239 = vmul.f32 %v232, %v74
  %v240 = vadd.f32 %v238, %v239
  %v242 = vcombine.high %v240, %v240
  %v244 = vunpack.c.l.s4 1966171168
  %v245 = vunpack.c.0.s8 %v244
  %v246 = vlaneseq
  %v247 = vshrl.u32 %v246, 7
  %v248 = vsub.s32 %v245, %v247
  %v249 = vrot.slane %v240, %v248
  %v251 = vunpack.c.l.s4 1966171168
  %v252 = vunpack.c.0.s8 %v251
  %v253 = vlaneseq
  %v254 = vshrl.u32 %v253, 7
  %v255 = vsub.s32 %v252, %v254
  %v256 = vrot.slane %v242, %v255
  %v257 = vcombine.high %v249, %v249
  %v258 = vcombine.high %v256, %v256
  %v260 = vunpack.c.l.s4 1966171168
  %v261 = vunpack.c.0.s8 %v260
  %v262 = vlaneseq
  %v263 = vshrl.u32 %v262, 7
  %v264 = vsub.s32 %v261, %v263
  %v265 = vrot.slane %v249, %v264
  %v267 = vunpack.c.l.s4 1966171168
  %v268 = vunpack.c.0.s8 %v267
  %v269 = vlaneseq
  %v270 = vshrl.u32 %v269, 7
  %v271 = vsub.s32 %v268, %v270
  %v272 = vrot.slane %v256, %v271
  %v274 = vunpack.c.l.s4 1966171168
  %v275 = vunpack.c.0.s8 %v274
  %v276 = vlaneseq
  %v277 = vshrl.u32 %v276, 7
  %v278 = vsub.s32 %v275, %v277
  %v279 = vrot.slane %v257, %v278
  %v281 = vunpack.c.l.s4 1966171168
  %v282 = vunpack.c.0.s8 %v281
  %v283 = vlaneseq
  %v284 = vshrl.u32 %v283, 7
  %v285 = vsub.s32 %v282, %v284
  %v286 = vrot.slane %v258, %v285
  %v287 = vcombine.high %v265, %v265
  %v288 = vcombine.high %v272, %v272
  %v289 = vcombine.high %v279, %v279
  %v290 = vcombine.high %v286, %v286
  %299 = vst [vmem:[#allocation3] sm:$0x1] %v265
  %300 = vst [vmem:[#allocation3 + $0x8] sm:$0x1] %v279
  %301 = vst [vmem:[#allocation3 + $0x10] sm:$0x1] %v287
  %302 = vst [vmem:[#allocation3 + $0x18] sm:$0x1] %v289
  %303 = vst [vmem:[#allocation3 + $0x20] sm:$0x1] %v272
  %304 = vst [vmem:[#allocation3 + $0x28] sm:$0x1] %v286
  %305 = vst [vmem:[#allocation3 + $0x30] sm:$0x1] %v288
  %306 = vst [vmem:[#allocation3 + $0x38] sm:$0x1] %v290
  %s307 = scalar_lea.vmem %s0, 24
  %v308 = vld [vmem:[%s307] sm:$0xff]
  %v309 = vld [vmem:[%s307 + $0x8] sm:$0xff]
  %v310 = vld [vmem:[%s307 + $0x10] sm:$0xff]
  %311 = vmatprep.subr.mxu0 %v20
  %312 = vmatpush1.msra.mxu0 %v19
  %313 = vmatprep.subr.mxu0 %v23
  %314 = vmatpush1.msra.mxu0 %v22
  %315 = vmatprep.subr.mxu0 %v26
  %316 = vmatpush1.msra.mxu0 %v25
  %317 = vmatprep.subr.mxu0 %v29
  %318 = vmatpush1.msra.mxu0 %v28
  %319 = vmatprep.subr.mxu0 %v32
  %320 = vmatpush1.msra.mxu0 %v31
  %321 = vmatprep.subr.mxu0 %v35
  %322 = vmatpush1.msra.mxu0 %v34
  %323 = vmatprep.subr.mxu0 %v38
  %324 = vmatpush1.msra.mxu0 %v37
  %325 = vmatprep.subr.mxu0 %v41
  %326 = vmatpush1.msra.mxu0 %v40
  %327 = vmatprep.subr.mxu0 %v44
  %328 = vmatpush1.msra.mxu0 %v43
  %329 = vmatprep.subr.mxu0 %v47
  %330 = vmatpush1.msra.mxu0 %v46
  %331 = vmatprep.subr.mxu0 %v50
  %332 = vmatpush1.msra.mxu0 %v49
  %333 = vmatprep.subr.mxu0 %v53
  %334 = vmatpush1.msra.mxu0 %v52
  %335 = vmatprep.subr.mxu0 %v56
  %336 = vmatpush1.msra.mxu0 %v55
  %337 = vmatprep.subr.mxu0 %v59
  %338 = vmatpush1.msra.mxu0 %v58
  %339 = vmatprep.subr.mxu0 %v62
  %340 = vmatpush1.msra.mxu0 %v61
  %341 = vmatprep.subr.mxu0 %v65
  %342 = vmatpush1.msra.mxu0 %v64
  %343 = vmatprep.subr.mxu0 0.0
  %344 = vmatpush1.msra.mxu0 0.0
  %345 = vmatprep.subr.mxu0 0.0
  %346 = vmatpush1.msra.mxu0 0.0
  %347 = vmatprep.subr.mxu0 0.0
  %348 = vmatpush1.msra.mxu0 0.0
  %349 = vmatprep.subr.mxu0 0.0
  %350 = vmatpush1.msra.mxu0 0.0
  %351 = vmatprep.subr.mxu0 0.0
  %352 = vmatpush1.msra.mxu0 0.0
  %353 = vmatprep.subr.mxu0 0.0
  %354 = vmatpush1.msra.mxu0 0.0
  %355 = vmatprep.subr.mxu0 0.0
  %356 = vmatpush1.msra.mxu0 0.0
  %357 = vmatprep.subr.mxu0 0.0
  %358 = vmatpush1.msra.mxu0 0.0
  %359 = vmatprep.subr.mxu0 0.0
  %360 = vmatpush1.msra.mxu0 0.0
  %361 = vmatprep.subr.mxu0 0.0
  %362 = vmatpush1.msra.mxu0 0.0
  %363 = vmatprep.subr.mxu0 0.0
  %364 = vmatpush1.msra.mxu0 0.0
  %365 = vmatprep.subr.mxu0 0.0
  %366 = vmatpush1.msra.mxu0 0.0
  %367 = vmatprep.subr.mxu0 0.0
  %368 = vmatpush1.msra.mxu0 0.0
  %369 = vmatprep.subr.mxu0 0.0
  %370 = vmatpush1.msra.mxu0 0.0
  %371 = vmatprep.subr.mxu0 0.0
  %372 = vmatpush1.msra.mxu0 0.0
  %373 = vmatprep.subr.mxu0 0.0
  %374 = vmatpush1.msra.mxu0 0.0
  %375 = vmatprep.mubr.f32.mxu0 0.0
  %376 = vmatmul.mubr.f32.gmra.mrb[0].mxu0 %v240
  %v377 = vpop.f32.mrb[0].mxu0
  %v378 = vadd.f32 0.0, %v377
  %v379 = vpop.f32.mrb[0].mxu0
  %v380 = vadd.f32 0.0, %v379
  %381 = vdwg.mxu0
  %382 = vmatprep.subr.mxu0 0.0
  %383 = vmatpush1.msra.mxu0 %v21
  %384 = vmatprep.subr.mxu0 0.0
  %385 = vmatpush1.msra.mxu0 %v24
  %386 = vmatprep.subr.mxu0 0.0
  %387 = vmatpush1.msra.mxu0 %v27
  %388 = vmatprep.subr.mxu0 0.0
  %389 = vmatpush1.msra.mxu0 %v30
  %390 = vmatprep.subr.mxu0 0.0
  %391 = vmatpush1.msra.mxu0 %v33
  %392 = vmatprep.subr.mxu0 0.0
  %393 = vmatpush1.msra.mxu0 %v36
  %394 = vmatprep.subr.mxu0 0.0
  %395 = vmatpush1.msra.mxu0 %v39
  %396 = vmatprep.subr.mxu0 0.0
  %397 = vmatpush1.msra.mxu0 %v42
  %398 = vmatprep.subr.mxu0 0.0
  %399 = vmatpush1.msra.mxu0 %v45
  %400 = vmatprep.subr.mxu0 0.0
  %401 = vmatpush1.msra.mxu0 %v48
  %402 = vmatprep.subr.mxu0 0.0
  %403 = vmatpush1.msra.mxu0 %v51
  %404 = vmatprep.subr.mxu0 0.0
  %405 = vmatpush1.msra.mxu0 %v54
  %406 = vmatprep.subr.mxu0 0.0
  %407 = vmatpush1.msra.mxu0 %v57
  %408 = vmatprep.subr.mxu0 0.0
  %409 = vmatpush1.msra.mxu0 %v60
  %410 = vmatprep.subr.mxu0 0.0
  %411 = vmatpush1.msra.mxu0 %v63
  %412 = vmatprep.subr.mxu0 0.0
  %413 = vmatpush1.msra.mxu0 %v66
  %414 = vmatprep.subr.mxu0 0.0
  %415 = vmatpush1.msra.mxu0 0.0
  %416 = vmatprep.subr.mxu0 0.0
  %417 = vmatpush1.msra.mxu0 0.0
  %418 = vmatprep.subr.mxu0 0.0
  %419 = vmatpush1.msra.mxu0 0.0
  %420 = vmatprep.subr.mxu0 0.0
  %421 = vmatpush1.msra.mxu0 0.0
  %422 = vmatprep.subr.mxu0 0.0
  %423 = vmatpush1.msra.mxu0 0.0
  %424 = vmatprep.subr.mxu0 0.0
  %425 = vmatpush1.msra.mxu0 0.0
  %426 = vmatprep.subr.mxu0 0.0
  %427 = vmatpush1.msra.mxu0 0.0
  %428 = vmatprep.subr.mxu0 0.0
  %429 = vmatpush1.msra.mxu0 0.0
  %430 = vmatprep.subr.mxu0 0.0
  %431 = vmatpush1.msra.mxu0 0.0
  %432 = vmatprep.subr.mxu0 0.0
  %433 = vmatpush1.msra.mxu0 0.0
  %434 = vmatprep.subr.mxu0 0.0
  %435 = vmatpush1.msra.mxu0 0.0
  %436 = vmatprep.subr.mxu0 0.0
  %437 = vmatpush1.msra.mxu0 0.0
  %438 = vmatprep.subr.mxu0 0.0
  %439 = vmatpush1.msra.mxu0 0.0
  %440 = vmatprep.subr.mxu0 0.0
  %441 = vmatpush1.msra.mxu0 0.0
  %442 = vmatprep.subr.mxu0 0.0
  %443 = vmatpush1.msra.mxu0 0.0
  %444 = vmatprep.subr.mxu0 0.0
  %445 = vmatpush1.msra.mxu0 0.0
  %446 = vmatprep.mubr.f32.mxu0 0.0
  %447 = vmatmul.mubr.f32.gmra.mrb[0].mxu0 %v240
  %v448 = vpop.f32.mrb[0].mxu0
  %v449 = vadd.f32 0.0, %v448
  %v450 = vpop.f32.mrb[0].mxu0
  %451 = vdwg.mxu0
  %v452 = vadd.f32 %v308, %v378
  %v453 = vxor.u32 %v452, 2147483648
  %v454 = vmul.f32 %v453, 1.442695
  %v455 = vpow.pop %v454
  %v456 = vadd.f32 %v455, 1.0
  %v457 = vrcp.pop %v456
  %v458 = vmul.f32 1.0, %v457
  %v459 = vadd.f32 %v309, %v380
  %v460 = vxor.u32 %v459, 2147483648
  %v461 = vmul.f32 %v460, 1.442695
  %v462 = vpow.pop %v461
  %v463 = vadd.f32 %v462, 1.0
  %v464 = vrcp.pop %v463
  %v465 = vmul.f32 1.0, %v464
  %v466 = vadd.f32 %v449, %v72
  %v467 = vmul.f32 %v458, %v466
  %v468 = vadd.f32 %v310, %v467
  %v469 = vtanh.pop %v468
  %v470 = vsub.f32 1.0, %v465
  %v471 = vmul.f32 %v470, %v469
  %v472 = vmul.f32 %v465, %v240
  %v473 = vadd.f32 %v471, %v472
  %v475 = vcombine.high %v473, %v473
  %v477 = vunpack.c.l.s4 1966171168
  %v478 = vunpack.c.0.s8 %v477
  %v479 = vlaneseq
  %v480 = vshrl.u32 %v479, 7
  %v481 = vsub.s32 %v478, %v480
  %v482 = vrot.slane %v473, %v481
  %v484 = vunpack.c.l.s4 1966171168
  %v485 = vunpack.c.0.s8 %v484
  %v486 = vlaneseq
  %v487 = vshrl.u32 %v486, 7
  %v488 = vsub.s32 %v485, %v487
  %v489 = vrot.slane %v475, %v488
  %v490 = vcombine.high %v482, %v482
  %v491 = vcombine.high %v489, %v489
  %v493 = vunpack.c.l.s4 1966171168
  %v494 = vunpack.c.0.s8 %v493
  %v495 = vlaneseq
  %v496 = vshrl.u32 %v495, 7
  %v497 = vsub.s32 %v494, %v496
  %v498 = vrot.slane %v482, %v497
  %v500 = vunpack.c.l.s4 1966171168
  %v501 = vunpack.c.0.s8 %v500
  %v502 = vlaneseq
  %v503 = vshrl.u32 %v502, 7
  %v504 = vsub.s32 %v501, %v503
  %v505 = vrot.slane %v489, %v504
  %v507 = vunpack.c.l.s4 1966171168
  %v508 = vunpack.c.0.s8 %v507
  %v509 = vlaneseq
  %v510 = vshrl.u32 %v509, 7
  %v511 = vsub.s32 %v508, %v510
  %v512 = vrot.slane %v490, %v511
  %v514 = vunpack.c.l.s4 1966171168
  %v515 = vunpack.c.0.s8 %v514
  %v516 = vlaneseq
  %v517 = vshrl.u32 %v516, 7
  %v518 = vsub.s32 %v515, %v517
  %v519 = vrot.slane %v491, %v518
  %v520 = vcombine.high %v498, %v498
  %v521 = vcombine.high %v505, %v505
  %v522 = vcombine.high %v512, %v512
  %v523 = vcombine.high %v519, %v519
  %532 = vst [vmem:[#allocation3 + $0x1] sm:$0x1] %v498
  %533 = vst [vmem:[#allocation3 + $0x9] sm:$0x1] %v512
  %534 = vst [vmem:[#allocation3 + $0x11] sm:$0x1] %v520
  %535 = vst [vmem:[#allocation3 + $0x19] sm:$0x1] %v522
  %536 = vst [vmem:[#allocation3 + $0x21] sm:$0x1] %v505
  %537 = vst [vmem:[#allocation3 + $0x29] sm:$0x1] %v519
  %538 = vst [vmem:[#allocation3 + $0x31] sm:$0x1] %v521
  %539 = vst [vmem:[#allocation3 + $0x39] sm:$0x1] %v523
  %s540 = scalar_lea.vmem %s0, 48
  %v541 = vld [vmem:[%s540] sm:$0xff]
  %v542 = vld [vmem:[%s540 + $0x8] sm:$0xff]
  %v543 = vld [vmem:[%s540 + $0x10] sm:$0xff]
  %544 = vmatprep.subr.mxu0 %v20
  %545 = vmatpush1.msra.mxu0 %v19
  %546 = vmatprep.subr.mxu0 %v23
  %547 = vmatpush1.msra.mxu0 %v22
  %548 = vmatprep.subr.mxu0 %v26
  %549 = vmatpush1.msra.mxu0 %v25
  %550 = vmatprep.subr.mxu0 %v29
  %551 = vmatpush1.msra.mxu0 %v28
  %552 = vmatprep.subr.mxu0 %v32
  %553 = vmatpush1.msra.mxu0 %v31
  %554 = vmatprep.subr.mxu0 %v35
  %555 = vmatpush1.msra.mxu0 %v34
  %556 = vmatprep.subr.mxu0 %v38
  %557 = vmatpush1.msra.mxu0 %v37
  %558 = vmatprep.subr.mxu0 %v41
  %559 = vmatpush1.msra.mxu0 %v40
  %560 = vmatprep.subr.mxu0 %v44
  %561 = vmatpush1.msra.mxu0 %v43
  %562 = vmatprep.subr.mxu0 %v47
  %563 = vmatpush1.msra.mxu0 %v46
  %564 = vmatprep.subr.mxu0 %v50
  %565 = vmatpush1.msra.mxu0 %v49
  %566 = vmatprep.subr.mxu0 %v53
  %567 = vmatpush1.msra.mxu0 %v52
  %568 = vmatprep.subr.mxu0 %v56
  %569 = vmatpush1.msra.mxu0 %v55
  %570 = vmatprep.subr.mxu0 %v59
  %571 = vmatpush1.msra.mxu0 %v58
  %572 = vmatprep.subr.mxu0 %v62
  %573 = vmatpush1.msra.mxu0 %v61
  %574 = vmatprep.subr.mxu0 %v65
  %575 = vmatpush1.msra.mxu0 %v64
  %576 = vmatprep.subr.mxu0 0.0
  %577 = vmatpush1.msra.mxu0 0.0
  %578 = vmatprep.subr.mxu0 0.0
  %579 = vmatpush1.msra.mxu0 0.0
  %580 = vmatprep.subr.mxu0 0.0
  %581 = vmatpush1.msra.mxu0 0.0
  %582 = vmatprep.subr.mxu0 0.0
  %583 = vmatpush1.msra.mxu0 0.0
  %584 = vmatprep.subr.mxu0 0.0
  %585 = vmatpush1.msra.mxu0 0.0
  %586 = vmatprep.subr.mxu0 0.0
  %587 = vmatpush1.msra.mxu0 0.0
  %588 = vmatprep.subr.mxu0 0.0
  %589 = vmatpush1.msra.mxu0 0.0
  %590 = vmatprep.subr.mxu0 0.0
  %591 = vmatpush1.msra.mxu0 0.0
  %592 = vmatprep.subr.mxu0 0.0
  %593 = vmatpush1.msra.mxu0 0.0
  %594 = vmatprep.subr.mxu0 0.0
  %595 = vmatpush1.msra.mxu0 0.0
  %596 = vmatprep.subr.mxu0 0.0
  %597 = vmatpush1.msra.mxu0 0.0
  %598 = vmatprep.subr.mxu0 0.0
  %599 = vmatpush1.msra.mxu0 0.0
  %600 = vmatprep.subr.mxu0 0.0
  %601 = vmatpush1.msra.mxu0 0.0
  %602 = vmatprep.subr.mxu0 0.0
  %603 = vmatpush1.msra.mxu0 0.0
  %604 = vmatprep.subr.mxu0 0.0
  %605 = vmatpush1.msra.mxu0 0.0
  %606 = vmatprep.subr.mxu0 0.0
  %607 = vmatpush1.msra.mxu0 0.0
  %608 = vmatprep.mubr.f32.mxu0 0.0
  %609 = vmatmul.mubr.f32.gmra.mrb[0].mxu0 %v473
  %v610 = vpop.f32.mrb[0].mxu0
  %v611 = vadd.f32 0.0, %v610
  %v612 = vpop.f32.mrb[0].mxu0
  %v613 = vadd.f32 0.0, %v612
  %614 = vdwg.mxu0
  %615 = vmatprep.subr.mxu0 0.0
  %616 = vmatpush1.msra.mxu0 %v21
  %617 = vmatprep.subr.mxu0 0.0
  %618 = vmatpush1.msra.mxu0 %v24
  %619 = vmatprep.subr.mxu0 0.0
  %620 = vmatpush1.msra.mxu0 %v27
  %621 = vmatprep.subr.mxu0 0.0
  %622 = vmatpush1.msra.mxu0 %v30
  %623 = vmatprep.subr.mxu0 0.0
  %624 = vmatpush1.msra.mxu0 %v33
  %625 = vmatprep.subr.mxu0 0.0
  %626 = vmatpush1.msra.mxu0 %v36
  %627 = vmatprep.subr.mxu0 0.0
  %628 = vmatpush1.msra.mxu0 %v39
  %629 = vmatprep.subr.mxu0 0.0
  %630 = vmatpush1.msra.mxu0 %v42
  %631 = vmatprep.subr.mxu0 0.0
  %632 = vmatpush1.msra.mxu0 %v45
  %633 = vmatprep.subr.mxu0 0.0
  %634 = vmatpush1.msra.mxu0 %v48
  %635 = vmatprep.subr.mxu0 0.0
  %636 = vmatpush1.msra.mxu0 %v51
  %637 = vmatprep.subr.mxu0 0.0
  %638 = vmatpush1.msra.mxu0 %v54
  %639 = vmatprep.subr.mxu0 0.0
  %640 = vmatpush1.msra.mxu0 %v57
  %641 = vmatprep.subr.mxu0 0.0
  %642 = vmatpush1.msra.mxu0 %v60
  %643 = vmatprep.subr.mxu0 0.0
  %644 = vmatpush1.msra.mxu0 %v63
  %645 = vmatprep.subr.mxu0 0.0
  %646 = vmatpush1.msra.mxu0 %v66
  %647 = vmatprep.subr.mxu0 0.0
  %648 = vmatpush1.msra.mxu0 0.0
  %649 = vmatprep.subr.mxu0 0.0
  %650 = vmatpush1.msra.mxu0 0.0
  %651 = vmatprep.subr.mxu0 0.0
  %652 = vmatpush1.msra.mxu0 0.0
  %653 = vmatprep.subr.mxu0 0.0
  %654 = vmatpush1.msra.mxu0 0.0
  %655 = vmatprep.subr.mxu0 0.0
  %656 = vmatpush1.msra.mxu0 0.0
  %657 = vmatprep.subr.mxu0 0.0
  %658 = vmatpush1.msra.mxu0 0.0
  %659 = vmatprep.subr.mxu0 0.0
  %660 = vmatpush1.msra.mxu0 0.0
  %661 = vmatprep.subr.mxu0 0.0
  %662 = vmatpush1.msra.mxu0 0.0
  %663 = vmatprep.subr.mxu0 0.0
  %664 = vmatpush1.msra.mxu0 0.0
  %665 = vmatprep.subr.mxu0 0.0
  %666 = vmatpush1.msra.mxu0 0.0
  %667 = vmatprep.subr.mxu0 0.0
  %668 = vmatpush1.msra.mxu0 0.0
  %669 = vmatprep.subr.mxu0 0.0
  %670 = vmatpush1.msra.mxu0 0.0
  %671 = vmatprep.subr.mxu0 0.0
  %672 = vmatpush1.msra.mxu0 0.0
  %673 = vmatprep.subr.mxu0 0.0
  %674 = vmatpush1.msra.mxu0 0.0
  %675 = vmatprep.subr.mxu0 0.0
  %676 = vmatpush1.msra.mxu0 0.0
  %677 = vmatprep.subr.mxu0 0.0
  %678 = vmatpush1.msra.mxu0 0.0
  %679 = vmatprep.mubr.f32.mxu0 0.0
  %680 = vmatmul.mubr.f32.gmra.mrb[0].mxu0 %v473
  %v681 = vpop.f32.mrb[0].mxu0
  %v682 = vadd.f32 0.0, %v681
  %v683 = vpop.f32.mrb[0].mxu0
  %684 = vdwg.mxu0
  %v685 = vadd.f32 %v541, %v611
  %v686 = vxor.u32 %v685, 2147483648
  %v687 = vmul.f32 %v686, 1.442695
  %v688 = vpow.pop %v687
  %v689 = vadd.f32 %v688, 1.0
  %v690 = vrcp.pop %v689
  %v691 = vmul.f32 1.0, %v690
  %v692 = vadd.f32 %v542, %v613
  %v693 = vxor.u32 %v692, 2147483648
  %v694 = vmul.f32 %v693, 1.442695
  %v695 = vpow.pop %v694
  %v696 = vadd.f32 %v695, 1.0
  %v697 = vrcp.pop %v696
  %v698 = vmul.f32 1.0, %v697
  %v699 = vadd.f32 %v682, %v72
  %v700 = vmul.f32 %v691, %v699
  %v701 = vadd.f32 %v543, %v700
  %v702 = vtanh.pop %v701
  %v703 = vsub.f32 1.0, %v698
  %v704 = vmul.f32 %v703, %v702
  %v705 = vmul.f32 %v698, %v473
  %v706 = vadd.f32 %v704, %v705
  %v708 = vcombine.high %v706, %v706
  %v710 = vunpack.c.l.s4 1966171168
  %v711 = vunpack.c.0.s8 %v710
  %v712 = vlaneseq
  %v713 = vshrl.u32 %v712, 7
  %v714 = vsub.s32 %v711, %v713
  %v715 = vrot.slane %v706, %v714
  %v717 = vunpack.c.l.s4 1966171168
  %v718 = vunpack.c.0.s8 %v717
  %v719 = vlaneseq
  %v720 = vshrl.u32 %v719, 7
  %v721 = vsub.s32 %v718, %v720
  %v722 = vrot.slane %v708, %v721
  %v723 = vcombine.high %v715, %v715
  %v724 = vcombine.high %v722, %v722
  %v726 = vunpack.c.l.s4 1966171168
  %v727 = vunpack.c.0.s8 %v726
  %v728 = vlaneseq
  %v729 = vshrl.u32 %v728, 7
  %v730 = vsub.s32 %v727, %v729
  %v731 = vrot.slane %v715, %v730
  %v733 = vunpack.c.l.s4 1966171168
  %v734 = vunpack.c.0.s8 %v733
  %v735 = vlaneseq
  %v736 = vshrl.u32 %v735, 7
  %v737 = vsub.s32 %v734, %v736
  %v738 = vrot.slane %v722, %v737
  %v740 = vunpack.c.l.s4 1966171168
  %v741 = vunpack.c.0.s8 %v740
  %v742 = vlaneseq
  %v743 = vshrl.u32 %v742, 7
  %v744 = vsub.s32 %v741, %v743
  %v745 = vrot.slane %v723, %v744
  %v747 = vunpack.c.l.s4 1966171168
  %v748 = vunpack.c.0.s8 %v747
  %v749 = vlaneseq
  %v750 = vshrl.u32 %v749, 7
  %v751 = vsub.s32 %v748, %v750
  %v752 = vrot.slane %v724, %v751
  %v753 = vcombine.high %v731, %v731
  %v754 = vcombine.high %v738, %v738
  %v755 = vcombine.high %v745, %v745
  %v756 = vcombine.high %v752, %v752
  %765 = vst [vmem:[#allocation3 + $0x2] sm:$0x1] %v731
  %766 = vst [vmem:[#allocation3 + $0xa] sm:$0x1] %v745
  %767 = vst [vmem:[#allocation3 + $0x12] sm:$0x1] %v753
  %768 = vst [vmem:[#allocation3 + $0x1a] sm:$0x1] %v755
  %769 = vst [vmem:[#allocation3 + $0x22] sm:$0x1] %v738
  %770 = vst [vmem:[#allocation3 + $0x2a] sm:$0x1] %v752
  %771 = vst [vmem:[#allocation3 + $0x32] sm:$0x1] %v754
  %772 = vst [vmem:[#allocation3 + $0x3a] sm:$0x1] %v756
  %s773 = scalar_lea.vmem %s0, 72
  %v774 = vld [vmem:[%s773] sm:$0xff]
  %v775 = vld [vmem:[%s773 + $0x8] sm:$0xff]
  %v776 = vld [vmem:[%s773 + $0x10] sm:$0xff]
  %777 = vmatprep.subr.mxu0 %v20
  %778 = vmatpush1.msra.mxu0 %v19
  %779 = vmatprep.subr.mxu0 %v23
  %780 = vmatpush1.msra.mxu0 %v22
  %781 = vmatprep.subr.mxu0 %v26
  %782 = vmatpush1.msra.mxu0 %v25
  %783 = vmatprep.subr.mxu0 %v29
  %784 = vmatpush1.msra.mxu0 %v28
  %785 = vmatprep.subr.mxu0 %v32
  %786 = vmatpush1.msra.mxu0 %v31
  %787 = vmatprep.subr.mxu0 %v35
  %788 = vmatpush1.msra.mxu0 %v34
  %789 = vmatprep.subr.mxu0 %v38
  %790 = vmatpush1.msra.mxu0 %v37
  %791 = vmatprep.subr.mxu0 %v41
  %792 = vmatpush1.msra.mxu0 %v40
  %793 = vmatprep.subr.mxu0 %v44
  %794 = vmatpush1.msra.mxu0 %v43
  %795 = vmatprep.subr.mxu0 %v47
  %796 = vmatpush1.msra.mxu0 %v46
  %797 = vmatprep.subr.mxu0 %v50
  %798 = vmatpush1.msra.mxu0 %v49
  %799 = vmatprep.subr.mxu0 %v53
  %800 = vmatpush1.msra.mxu0 %v52
  %801 = vmatprep.subr.mxu0 %v56
  %802 = vmatpush1.msra.mxu0 %v55
  %803 = vmatprep.subr.mxu0 %v59
  %804 = vmatpush1.msra.mxu0 %v58
  %805 = vmatprep.subr.mxu0 %v62
  %806 = vmatpush1.msra.mxu0 %v61
  %807 = vmatprep.subr.mxu0 %v65
  %808 = vmatpush1.msra.mxu0 %v64
  %809 = vmatprep.subr.mxu0 0.0
  %810 = vmatpush1.msra.mxu0 0.0
  %811 = vmatprep.subr.mxu0 0.0
  %812 = vmatpush1.msra.mxu0 0.0
  %813 = vmatprep.subr.mxu0 0.0
  %814 = vmatpush1.msra.mxu0 0.0
  %815 = vmatprep.subr.mxu0 0.0
  %816 = vmatpush1.msra.mxu0 0.0
  %817 = vmatprep.subr.mxu0 0.0
  %818 = vmatpush1.msra.mxu0 0.0
  %819 = vmatprep.subr.mxu0 0.0
  %820 = vmatpush1.msra.mxu0 0.0
  %821 = vmatprep.subr.mxu0 0.0
  %822 = vmatpush1.msra.mxu0 0.0
  %823 = vmatprep.subr.mxu0 0.0
  %824 = vmatpush1.msra.mxu0 0.0
  %825 = vmatprep.subr.mxu0 0.0
  %826 = vmatpush1.msra.mxu0 0.0
  %827 = vmatprep.subr.mxu0 0.0
  %828 = vmatpush1.msra.mxu0 0.0
  %829 = vmatprep.subr.mxu0 0.0
  %830 = vmatpush1.msra.mxu0 0.0
  %831 = vmatprep.subr.mxu0 0.0
  %832 = vmatpush1.msra.mxu0 0.0
  %833 = vmatprep.subr.mxu0 0.0
  %834 = vmatpush1.msra.mxu0 0.0
  %835 = vmatprep.subr.mxu0 0.0
  %836 = vmatpush1.msra.mxu0 0.0
  %837 = vmatprep.subr.mxu0 0.0
  %838 = vmatpush1.msra.mxu0 0.0
  %839 = vmatprep.subr.mxu0 0.0
  %840 = vmatpush1.msra.mxu0 0.0
  %841 = vmatprep.mubr.f32.mxu0 0.0
  %842 = vmatmul.mubr.f32.gmra.mrb[0].mxu0 %v706
  %v843 = vpop.f32.mrb[0].mxu0
  %v844 = vadd.f32 0.0, %v843
  %v845 = vpop.f32.mrb[0].mxu0
  %v846 = vadd.f32 0.0, %v845
  %847 = vdwg.mxu0
  %848 = vmatprep.subr.mxu0 0.0
  %849 = vmatpush1.msra.mxu0 %v21
  %850 = vmatprep.subr.mxu0 0.0
  %851 = vmatpush1.msra.mxu0 %v24
  %852 = vmatprep.subr.mxu0 0.0
  %853 = vmatpush1.msra.mxu0 %v27
  %854 = vmatprep.subr.mxu0 0.0
  %855 = vmatpush1.msra.mxu0 %v30
  %856 = vmatprep.subr.mxu0 0.0
  %857 = vmatpush1.msra.mxu0 %v33
  %858 = vmatprep.subr.mxu0 0.0
  %859 = vmatpush1.msra.mxu0 %v36
  %860 = vmatprep.subr.mxu0 0.0
  %861 = vmatpush1.msra.mxu0 %v39
  %862 = vmatprep.subr.mxu0 0.0
  %863 = vmatpush1.msra.mxu0 %v42
  %864 = vmatprep.subr.mxu0 0.0
  %865 = vmatpush1.msra.mxu0 %v45
  %866 = vmatprep.subr.mxu0 0.0
  %867 = vmatpush1.msra.mxu0 %v48
  %868 = vmatprep.subr.mxu0 0.0
  %869 = vmatpush1.msra.mxu0 %v51
  %870 = vmatprep.subr.mxu0 0.0
  %871 = vmatpush1.msra.mxu0 %v54
  %872 = vmatprep.subr.mxu0 0.0
  %873 = vmatpush1.msra.mxu0 %v57
  %874 = vmatprep.subr.mxu0 0.0
  %875 = vmatpush1.msra.mxu0 %v60
  %876 = vmatprep.subr.mxu0 0.0
  %877 = vmatpush1.msra.mxu0 %v63
  %878 = vmatprep.subr.mxu0 0.0
  %879 = vmatpush1.msra.mxu0 %v66
  %880 = vmatprep.subr.mxu0 0.0
  %881 = vmatpush1.msra.mxu0 0.0
  %882 = vmatprep.subr.mxu0 0.0
  %883 = vmatpush1.msra.mxu0 0.0
  %884 = vmatprep.subr.mxu0 0.0
  %885 = vmatpush1.msra.mxu0 0.0
  %886 = vmatprep.subr.mxu0 0.0
  %887 = vmatpush1.msra.mxu0 0.0
  %888 = vmatprep.subr.mxu0 0.0
  %889 = vmatpush1.msra.mxu0 0.0
  %890 = vmatprep.subr.mxu0 0.0
  %891 = vmatpush1.msra.mxu0 0.0
  %892 = vmatprep.subr.mxu0 0.0
  %893 = vmatpush1.msra.mxu0 0.0
  %894 = vmatprep.subr.mxu0 0.0
  %895 = vmatpush1.msra.mxu0 0.0
  %896 = vmatprep.subr.mxu0 0.0
  %897 = vmatpush1.msra.mxu0 0.0
  %898 = vmatprep.subr.mxu0 0.0
  %899 = vmatpush1.msra.mxu0 0.0
  %900 = vmatprep.subr.mxu0 0.0
  %901 = vmatpush1.msra.mxu0 0.0
  %902 = vmatprep.subr.mxu0 0.0
  %903 = vmatpush1.msra.mxu0 0.0
  %904 = vmatprep.subr.mxu0 0.0
  %905 = vmatpush1.msra.mxu0 0.0
  %906 = vmatprep.subr.mxu0 0.0
  %907 = vmatpush1.msra.mxu0 0.0
  %908 = vmatprep.subr.mxu0 0.0
  %909 = vmatpush1.msra.mxu0 0.0
  %910 = vmatprep.subr.mxu0 0.0
  %911 = vmatpush1.msra.mxu0 0.0
  %912 = vmatprep.mubr.f32.mxu0 0.0
  %913 = vmatmul.mubr.f32.gmra.mrb[0].mxu0 %v706
  %v914 = vpop.f32.mrb[0].mxu0
  %v915 = vadd.f32 0.0, %v914
  %v916 = vpop.f32.mrb[0].mxu0
  %917 = vdwg.mxu0
  %v918 = vadd.f32 %v774, %v844
  %v919 = vxor.u32 %v918, 2147483648
  %v920 = vmul.f32 %v919, 1.442695
  %v921 = vpow.pop %v920
  %v922 = vadd.f32 %v921, 1.0
  %v923 = vrcp.pop %v922
  %v924 = vmul.f32 1.0, %v923
  %v925 = vadd.f32 %v775, %v846
  %v926 = vxor.u32 %v925, 2147483648
  %v927 = vmul.f32 %v926, 1.442695
  %v928 = vpow.pop %v927
  %v929 = vadd.f32 %v928, 1.0
  %v930 = vrcp.pop %v929
  %v931 = vmul.f32 1.0, %v930
  %v932 = vadd.f32 %v915, %v72
  %v933 = vmul.f32 %v924, %v932
  %v934 = vadd.f32 %v776, %v933
  %v935 = vtanh.pop %v934
  %v936 = vsub.f32 1.0, %v931
  %v937 = vmul.f32 %v936, %v935
  %v938 = vmul.f32 %v931, %v706
  %v939 = vadd.f32 %v937, %v938
  %v941 = vcombine.high %v939, %v939
  %v943 = vunpack.c.l.s4 1966171168
  %v944 = vunpack.c.0.s8 %v943
  %v945 = vlaneseq
  %v946 = vshrl.u32 %v945, 7
  %v947 = vsub.s32 %v944, %v946
  %v948 = vrot.slane %v939, %v947
  %v950 = vunpack.c.l.s4 1966171168
  %v951 = vunpack.c.0.s8 %v950
  %v952 = vlaneseq
  %v953 = vshrl.u32 %v952, 7
  %v954 = vsub.s32 %v951, %v953
  %v955 = vrot.slane %v941, %v954
  %v956 = vcombine.high %v948, %v948
  %v957 = vcombine.high %v955, %v955
  %v959 = vunpack.c.l.s4 1966171168
  %v960 = vunpack.c.0.s8 %v959
  %v961 = vlaneseq
  %v962 = vshrl.u32 %v961, 7
  %v963 = vsub.s32 %v960, %v962
  %v964 = vrot.slane %v948, %v963
  %v966 = vunpack.c.l.s4 1966171168
  %v967 = vunpack.c.0.s8 %v966
  %v968 = vlaneseq
  %v969 = vshrl.u32 %v968, 7
  %v970 = vsub.s32 %v967, %v969
  %v971 = vrot.slane %v955, %v970
  %v973 = vunpack.c.l.s4 1966171168
  %v974 = vunpack.c.0.s8 %v973
  %v975 = vlaneseq
  %v976 = vshrl.u32 %v975, 7
  %v977 = vsub.s32 %v974, %v976
  %v978 = vrot.slane %v956, %v977
  %v980 = vunpack.c.l.s4 1966171168
  %v981 = vunpack.c.0.s8 %v980
  %v982 = vlaneseq
  %v983 = vshrl.u32 %v982, 7
  %v984 = vsub.s32 %v981, %v983
  %v985 = vrot.slane %v957, %v984
  %v986 = vcombine.high %v964, %v964
  %v987 = vcombine.high %v971, %v971
  %v988 = vcombine.high %v978, %v978
  %v989 = vcombine.high %v985, %v985
  %998 = vst [vmem:[#allocation3 + $0x3] sm:$0x1] %v964
  %999 = vst [vmem:[#allocation3 + $0xb] sm:$0x1] %v978
  %1000 = vst [vmem:[#allocation3 + $0x13] sm:$0x1] %v986
  %1001 = vst [vmem:[#allocation3 + $0x1b] sm:$0x1] %v988
  %1002 = vst [vmem:[#allocation3 + $0x23] sm:$0x1] %v971
  %1003 = vst [vmem:[#allocation3 + $0x2b] sm:$0x1] %v985
  %1004 = vst [vmem:[#allocation3 + $0x33] sm:$0x1] %v987
  %1005 = vst [vmem:[#allocation3 + $0x3b] sm:$0x1] %v989
  %s1006 = scalar_lea.vmem %s0, 96
  %v1007 = vld [vmem:[%s1006] sm:$0xff]
  %v1008 = vld [vmem:[%s1006 + $0x8] sm:$0xff]
  %v1009 = vld [vmem:[%s1006 + $0x10] sm:$0xff]
  %1010 = vmatprep.subr.mxu0 %v20
  %1011 = vmatpush1.msra.mxu0 %v19
  %1012 = vmatprep.subr.mxu0 %v23
  %1013 = vmatpush1.msra.mxu0 %v22
  %1014 = vmatprep.subr.mxu0 %v26
  %1015 = vmatpush1.msra.mxu0 %v25
  %1016 = vmatprep.subr.mxu0 %v29
  %1017 = vmatpush1.msra.mxu0 %v28
  %1018 = vmatprep.subr.mxu0 %v32
  %1019 = vmatpush1.msra.mxu0 %v31
  %1020 = vmatprep.subr.mxu0 %v35
  %1021 = vmatpush1.msra.mxu0 %v34
  %1022 = vmatprep.subr.mxu0 %v38
  %1023 = vmatpush1.msra.mxu0 %v37
  %1024 = vmatprep.subr.mxu0 %v41
  %1025 = vmatpush1.msra.mxu0 %v40
  %1026 = vmatprep.subr.mxu0 %v44
  %1027 = vmatpush1.msra.mxu0 %v43
  %1028 = vmatprep.subr.mxu0 %v47
  %1029 = vmatpush1.msra.mxu0 %v46
  %1030 = vmatprep.subr.mxu0 %v50
  %1031 = vmatpush1.msra.mxu0 %v49
  %1032 = vmatprep.subr.mxu0 %v53
  %1033 = vmatpush1.msra.mxu0 %v52
  %1034 = vmatprep.subr.mxu0 %v56
  %1035 = vmatpush1.msra.mxu0 %v55
  %1036 = vmatprep.subr.mxu0 %v59
  %1037 = vmatpush1.msra.mxu0 %v58
  %1038 = vmatprep.subr.mxu0 %v62
  %1039 = vmatpush1.msra.mxu0 %v61
  %1040 = vmatprep.subr.mxu0 %v65
  %1041 = vmatpush1.msra.mxu0 %v64
  %1042 = vmatprep.subr.mxu0 0.0
  %1043 = vmatpush1.msra.mxu0 0.0
  %1044 = vmatprep.subr.mxu0 0.0
  %1045 = vmatpush1.msra.mxu0 0.0
  %1046 = vmatprep.subr.mxu0 0.0
  %1047 = vmatpush1.msra.mxu0 0.0
  %1048 = vmatprep.subr.mxu0 0.0
  %1049 = vmatpush1.msra.mxu0 0.0
  %1050 = vmatprep.subr.mxu0 0.0
  %1051 = vmatpush1.msra.mxu0 0.0
  %1052 = vmatprep.subr.mxu0 0.0
  %1053 = vmatpush1.msra.mxu0 0.0
  %1054 = vmatprep.subr.mxu0 0.0
  %1055 = vmatpush1.msra.mxu0 0.0
  %1056 = vmatprep.subr.mxu0 0.0
  %1057 = vmatpush1.msra.mxu0 0.0
  %1058 = vmatprep.subr.mxu0 0.0
  %1059 = vmatpush1.msra.mxu0 0.0
  %1060 = vmatprep.subr.mxu0 0.0
  %1061 = vmatpush1.msra.mxu0 0.0
  %1062 = vmatprep.subr.mxu0 0.0
  %1063 = vmatpush1.msra.mxu0 0.0
  %1064 = vmatprep.subr.mxu0 0.0
  %1065 = vmatpush1.msra.mxu0 0.0
  %1066 = vmatprep.subr.mxu0 0.0
  %1067 = vmatpush1.msra.mxu0 0.0
  %1068 = vmatprep.subr.mxu0 0.0
  %1069 = vmatpush1.msra.mxu0 0.0
  %1070 = vmatprep.subr.mxu0 0.0
  %1071 = vmatpush1.msra.mxu0 0.0
  %1072 = vmatprep.subr.mxu0 0.0
  %1073 = vmatpush1.msra.mxu0 0.0
  %1074 = vmatprep.mubr.f32.mxu0 0.0
  %1075 = vmatmul.mubr.f32.gmra.mrb[0].mxu0 %v939
  %v1076 = vpop.f32.mrb[0].mxu0
  %v1077 = vadd.f32 0.0, %v1076
  %v1078 = vpop.f32.mrb[0].mxu0
  %v1079 = vadd.f32 0.0, %v1078
  %1080 = vdwg.mxu0
  %1081 = vmatprep.subr.mxu0 0.0
  %1082 = vmatpush1.msra.mxu0 %v21
  %1083 = vmatprep.subr.mxu0 0.0
  %1084 = vmatpush1.msra.mxu0 %v24
  %1085 = vmatprep.subr.mxu0 0.0
  %1086 = vmatpush1.msra.mxu0 %v27
  %1087 = vmatprep.subr.mxu0 0.0
  %1088 = vmatpush1.msra.mxu0 %v30
  %1089 = vmatprep.subr.mxu0 0.0
  %1090 = vmatpush1.msra.mxu0 %v33
  %1091 = vmatprep.subr.mxu0 0.0
  %1092 = vmatpush1.msra.mxu0 %v36
  %1093 = vmatprep.subr.mxu0 0.0
  %1094 = vmatpush1.msra.mxu0 %v39
  %1095 = vmatprep.subr.mxu0 0.0
  %1096 = vmatpush1.msra.mxu0 %v42
  %1097 = vmatprep.subr.mxu0 0.0
  %1098 = vmatpush1.msra.mxu0 %v45
  %1099 = vmatprep.subr.mxu0 0.0
  %1100 = vmatpush1.msra.mxu0 %v48
  %1101 = vmatprep.subr.mxu0 0.0
  %1102 = vmatpush1.msra.mxu0 %v51
  %1103 = vmatprep.subr.mxu0 0.0
  %1104 = vmatpush1.msra.mxu0 %v54
  %1105 = vmatprep.subr.mxu0 0.0
  %1106 = vmatpush1.msra.mxu0 %v57
  %1107 = vmatprep.subr.mxu0 0.0
  %1108 = vmatpush1.msra.mxu0 %v60
  %1109 = vmatprep.subr.mxu0 0.0
  %1110 = vmatpush1.msra.mxu0 %v63
  %1111 = vmatprep.subr.mxu0 0.0
  %1112 = vmatpush1.msra.mxu0 %v66
  %1113 = vmatprep.subr.mxu0 0.0
  %1114 = vmatpush1.msra.mxu0 0.0
  %1115 = vmatprep.subr.mxu0 0.0
  %1116 = vmatpush1.msra.mxu0 0.0
  %1117 = vmatprep.subr.mxu0 0.0
  %1118 = vmatpush1.msra.mxu0 0.0
  %1119 = vmatprep.subr.mxu0 0.0
  %1120 = vmatpush1.msra.mxu0 0.0
  %1121 = vmatprep.subr.mxu0 0.0
  %1122 = vmatpush1.msra.mxu0 0.0
  %1123 = vmatprep.subr.mxu0 0.0
  %1124 = vmatpush1.msra.mxu0 0.0
  %1125 = vmatprep.subr.mxu0 0.0
  %1126 = vmatpush1.msra.mxu0 0.0
  %1127 = vmatprep.subr.mxu0 0.0
  %1128 = vmatpush1.msra.mxu0 0.0
  %1129 = vmatprep.subr.mxu0 0.0
  %1130 = vmatpush1.msra.mxu0 0.0
  %1131 = vmatprep.subr.mxu0 0.0
  %1132 = vmatpush1.msra.mxu0 0.0
  %1133 = vmatprep.subr.mxu0 0.0
  %1134 = vmatpush1.msra.mxu0 0.0
  %1135 = vmatprep.subr.mxu0 0.0
  %1136 = vmatpush1.msra.mxu0 0.0
  %1137 = vmatprep.subr.mxu0 0.0
  %1138 = vmatpush1.msra.mxu0 0.0
  %1139 = vmatprep.subr.mxu0 0.0
  %1140 = vmatpush1.msra.mxu0 0.0
  %1141 = vmatprep.subr.mxu0 0.0
  %1142 = vmatpush1.msra.mxu0 0.0
  %1143 = vmatprep.subr.mxu0 0.0
  %1144 = vmatpush1.msra.mxu0 0.0
  %1145 = vmatprep.mubr.f32.mxu0 0.0
  %1146 = vmatmul.mubr.f32.gmra.mrb[0].mxu0 %v939
  %v1147 = vpop.f32.mrb[0].mxu0
  %v1148 = vadd.f32 0.0, %v1147
  %v1149 = vpop.f32.mrb[0].mxu0
  %1150 = vdwg.mxu0
  %v1151 = vadd.f32 %v1007, %v1077
  %v1152 = vxor.u32 %v1151, 2147483648
  %v1153 = vmul.f32 %v1152, 1.442695
  %v1154 = vpow.pop %v1153
  %v1155 = vadd.f32 %v1154, 1.0
  %v1156 = vrcp.pop %v1155
  %v1157 = vmul.f32 1.0, %v1156
  %v1158 = vadd.f32 %v1008, %v1079
  %v1159 = vxor.u32 %v1158, 2147483648
  %v1160 = vmul.f32 %v1159, 1.442695
  %v1161 = vpow.pop %v1160
  %v1162 = vadd.f32 %v1161, 1.0
  %v1163 = vrcp.pop %v1162
  %v1164 = vmul.f32 1.0, %v1163
  %v1165 = vadd.f32 %v1148, %v72
  %v1166 = vmul.f32 %v1157, %v1165
  %v1167 = vadd.f32 %v1009, %v1166
  %v1168 = vtanh.pop %v1167
  %v1169 = vsub.f32 1.0, %v1164
  %v1170 = vmul.f32 %v1169, %v1168
  %v1171 = vmul.f32 %v1164, %v939
  %v1172 = vadd.f32 %v1170, %v1171
  %v1174 = vcombine.high %v1172, %v1172
  %v1176 = vunpack.c.l.s4 1966171168
  %v1177 = vunpack.c.0.s8 %v1176
  %v1178 = vlaneseq
  %v1179 = vshrl.u32 %v1178, 7
  %v1180 = vsub.s32 %v1177, %v1179
  %v1181 = vrot.slane %v1172, %v1180
  %v1183 = vunpack.c.l.s4 1966171168
  %v1184 = vunpack.c.0.s8 %v1183
  %v1185 = vlaneseq
  %v1186 = vshrl.u32 %v1185, 7
  %v1187 = vsub.s32 %v1184, %v1186
  %v1188 = vrot.slane %v1174, %v1187
  %v1189 = vcombine.high %v1181, %v1181
  %v1190 = vcombine.high %v1188, %v1188
  %v1192 = vunpack.c.l.s4 1966171168
  %v1193 = vunpack.c.0.s8 %v1192
  %v1194 = vlaneseq
  %v1195 = vshrl.u32 %v1194, 7
  %v1196 = vsub.s32 %v1193, %v1195
  %v1197 = vrot.slane %v1181, %v1196
  %v1199 = vunpack.c.l.s4 1966171168
  %v1200 = vunpack.c.0.s8 %v1199
  %v1201 = vlaneseq
  %v1202 = vshrl.u32 %v1201, 7
  %v1203 = vsub.s32 %v1200, %v1202
  %v1204 = vrot.slane %v1188, %v1203
  %v1206 = vunpack.c.l.s4 1966171168
  %v1207 = vunpack.c.0.s8 %v1206
  %v1208 = vlaneseq
  %v1209 = vshrl.u32 %v1208, 7
  %v1210 = vsub.s32 %v1207, %v1209
  %v1211 = vrot.slane %v1189, %v1210
  %v1213 = vunpack.c.l.s4 1966171168
  %v1214 = vunpack.c.0.s8 %v1213
  %v1215 = vlaneseq
  %v1216 = vshrl.u32 %v1215, 7
  %v1217 = vsub.s32 %v1214, %v1216
  %v1218 = vrot.slane %v1190, %v1217
  %v1219 = vcombine.high %v1197, %v1197
  %v1220 = vcombine.high %v1204, %v1204
  %v1221 = vcombine.high %v1211, %v1211
  %v1222 = vcombine.high %v1218, %v1218
  %1231 = vst [vmem:[#allocation3 + $0x4] sm:$0x1] %v1197
  %1232 = vst [vmem:[#allocation3 + $0xc] sm:$0x1] %v1211
  %1233 = vst [vmem:[#allocation3 + $0x14] sm:$0x1] %v1219
  %1234 = vst [vmem:[#allocation3 + $0x1c] sm:$0x1] %v1221
  %1235 = vst [vmem:[#allocation3 + $0x24] sm:$0x1] %v1204
  %1236 = vst [vmem:[#allocation3 + $0x2c] sm:$0x1] %v1218
  %1237 = vst [vmem:[#allocation3 + $0x34] sm:$0x1] %v1220
  %1238 = vst [vmem:[#allocation3 + $0x3c] sm:$0x1] %v1222
  %s1239 = scalar_lea.vmem %s0, 120
  %v1240 = vld [vmem:[%s1239] sm:$0xff]
  %v1241 = vld [vmem:[%s1239 + $0x8] sm:$0xff]
  %v1242 = vld [vmem:[%s1239 + $0x10] sm:$0xff]
  %1243 = vmatprep.subr.mxu0 %v20
  %1244 = vmatpush1.msra.mxu0 %v19
  %1245 = vmatprep.subr.mxu0 %v23
  %1246 = vmatpush1.msra.mxu0 %v22
  %1247 = vmatprep.subr.mxu0 %v26
  %1248 = vmatpush1.msra.mxu0 %v25
  %1249 = vmatprep.subr.mxu0 %v29
  %1250 = vmatpush1.msra.mxu0 %v28
  %1251 = vmatprep.subr.mxu0 %v32
  %1252 = vmatpush1.msra.mxu0 %v31
  %1253 = vmatprep.subr.mxu0 %v35
  %1254 = vmatpush1.msra.mxu0 %v34
  %1255 = vmatprep.subr.mxu0 %v38
  %1256 = vmatpush1.msra.mxu0 %v37
  %1257 = vmatprep.subr.mxu0 %v41
  %1258 = vmatpush1.msra.mxu0 %v40
  %1259 = vmatprep.subr.mxu0 %v44
  %1260 = vmatpush1.msra.mxu0 %v43
  %1261 = vmatprep.subr.mxu0 %v47
  %1262 = vmatpush1.msra.mxu0 %v46
  %1263 = vmatprep.subr.mxu0 %v50
  %1264 = vmatpush1.msra.mxu0 %v49
  %1265 = vmatprep.subr.mxu0 %v53
  %1266 = vmatpush1.msra.mxu0 %v52
  %1267 = vmatprep.subr.mxu0 %v56
  %1268 = vmatpush1.msra.mxu0 %v55
  %1269 = vmatprep.subr.mxu0 %v59
  %1270 = vmatpush1.msra.mxu0 %v58
  %1271 = vmatprep.subr.mxu0 %v62
  %1272 = vmatpush1.msra.mxu0 %v61
  %1273 = vmatprep.subr.mxu0 %v65
  %1274 = vmatpush1.msra.mxu0 %v64
  %1275 = vmatprep.subr.mxu0 0.0
  %1276 = vmatpush1.msra.mxu0 0.0
  %1277 = vmatprep.subr.mxu0 0.0
  %1278 = vmatpush1.msra.mxu0 0.0
  %1279 = vmatprep.subr.mxu0 0.0
  %1280 = vmatpush1.msra.mxu0 0.0
  %1281 = vmatprep.subr.mxu0 0.0
  %1282 = vmatpush1.msra.mxu0 0.0
  %1283 = vmatprep.subr.mxu0 0.0
  %1284 = vmatpush1.msra.mxu0 0.0
  %1285 = vmatprep.subr.mxu0 0.0
  %1286 = vmatpush1.msra.mxu0 0.0
  %1287 = vmatprep.subr.mxu0 0.0
  %1288 = vmatpush1.msra.mxu0 0.0
  %1289 = vmatprep.subr.mxu0 0.0
  %1290 = vmatpush1.msra.mxu0 0.0
  %1291 = vmatprep.subr.mxu0 0.0
  %1292 = vmatpush1.msra.mxu0 0.0
  %1293 = vmatprep.subr.mxu0 0.0
  %1294 = vmatpush1.msra.mxu0 0.0
  %1295 = vmatprep.subr.mxu0 0.0
  %1296 = vmatpush1.msra.mxu0 0.0
  %1297 = vmatprep.subr.mxu0 0.0
  %1298 = vmatpush1.msra.mxu0 0.0
  %1299 = vmatprep.subr.mxu0 0.0
  %1300 = vmatpush1.msra.mxu0 0.0
  %1301 = vmatprep.subr.mxu0 0.0
  %1302 = vmatpush1.msra.mxu0 0.0
  %1303 = vmatprep.subr.mxu0 0.0
  %1304 = vmatpush1.msra.mxu0 0.0
  %1305 = vmatprep.subr.mxu0 0.0
  %1306 = vmatpush1.msra.mxu0 0.0
  %1307 = vmatprep.mubr.f32.mxu0 0.0
  %1308 = vmatmul.mubr.f32.gmra.mrb[0].mxu0 %v1172
  %v1309 = vpop.f32.mrb[0].mxu0
  %v1310 = vadd.f32 0.0, %v1309
  %v1311 = vpop.f32.mrb[0].mxu0
  %v1312 = vadd.f32 0.0, %v1311
  %1313 = vdwg.mxu0
  %1314 = vmatprep.subr.mxu0 0.0
  %1315 = vmatpush1.msra.mxu0 %v21
  %1316 = vmatprep.subr.mxu0 0.0
  %1317 = vmatpush1.msra.mxu0 %v24
  %1318 = vmatprep.subr.mxu0 0.0
  %1319 = vmatpush1.msra.mxu0 %v27
  %1320 = vmatprep.subr.mxu0 0.0
  %1321 = vmatpush1.msra.mxu0 %v30
  %1322 = vmatprep.subr.mxu0 0.0
  %1323 = vmatpush1.msra.mxu0 %v33
  %1324 = vmatprep.subr.mxu0 0.0
  %1325 = vmatpush1.msra.mxu0 %v36
  %1326 = vmatprep.subr.mxu0 0.0
  %1327 = vmatpush1.msra.mxu0 %v39
  %1328 = vmatprep.subr.mxu0 0.0
  %1329 = vmatpush1.msra.mxu0 %v42
  %1330 = vmatprep.subr.mxu0 0.0
  %1331 = vmatpush1.msra.mxu0 %v45
  %1332 = vmatprep.subr.mxu0 0.0
  %1333 = vmatpush1.msra.mxu0 %v48
  %1334 = vmatprep.subr.mxu0 0.0
  %1335 = vmatpush1.msra.mxu0 %v51
  %1336 = vmatprep.subr.mxu0 0.0
  %1337 = vmatpush1.msra.mxu0 %v54
  %1338 = vmatprep.subr.mxu0 0.0
  %1339 = vmatpush1.msra.mxu0 %v57
  %1340 = vmatprep.subr.mxu0 0.0
  %1341 = vmatpush1.msra.mxu0 %v60
  %1342 = vmatprep.subr.mxu0 0.0
  %1343 = vmatpush1.msra.mxu0 %v63
  %1344 = vmatprep.subr.mxu0 0.0
  %1345 = vmatpush1.msra.mxu0 %v66
  %1346 = vmatprep.subr.mxu0 0.0
  %1347 = vmatpush1.msra.mxu0 0.0
  %1348 = vmatprep.subr.mxu0 0.0
  %1349 = vmatpush1.msra.mxu0 0.0
  %1350 = vmatprep.subr.mxu0 0.0
  %1351 = vmatpush1.msra.mxu0 0.0
  %1352 = vmatprep.subr.mxu0 0.0
  %1353 = vmatpush1.msra.mxu0 0.0
  %1354 = vmatprep.subr.mxu0 0.0
  %1355 = vmatpush1.msra.mxu0 0.0
  %1356 = vmatprep.subr.mxu0 0.0
  %1357 = vmatpush1.msra.mxu0 0.0
  %1358 = vmatprep.subr.mxu0 0.0
  %1359 = vmatpush1.msra.mxu0 0.0
  %1360 = vmatprep.subr.mxu0 0.0
  %1361 = vmatpush1.msra.mxu0 0.0
  %1362 = vmatprep.subr.mxu0 0.0
  %1363 = vmatpush1.msra.mxu0 0.0
  %1364 = vmatprep.subr.mxu0 0.0
  %1365 = vmatpush1.msra.mxu0 0.0
  %1366 = vmatprep.subr.mxu0 0.0
  %1367 = vmatpush1.msra.mxu0 0.0
  %1368 = vmatprep.subr.mxu0 0.0
  %1369 = vmatpush1.msra.mxu0 0.0
  %1370 = vmatprep.subr.mxu0 0.0
  %1371 = vmatpush1.msra.mxu0 0.0
  %1372 = vmatprep.subr.mxu0 0.0
  %1373 = vmatpush1.msra.mxu0 0.0
  %1374 = vmatprep.subr.mxu0 0.0
  %1375 = vmatpush1.msra.mxu0 0.0
  %1376 = vmatprep.subr.mxu0 0.0
  %1377 = vmatpush1.msra.mxu0 0.0
  %1378 = vmatprep.mubr.f32.mxu0 0.0
  %1379 = vmatmul.mubr.f32.gmra.mrb[0].mxu0 %v1172
  %v1380 = vpop.f32.mrb[0].mxu0
  %v1381 = vadd.f32 0.0, %v1380
  %v1382 = vpop.f32.mrb[0].mxu0
  %1383 = vdwg.mxu0
  %v1384 = vadd.f32 %v1240, %v1310
  %v1385 = vxor.u32 %v1384, 2147483648
  %v1386 = vmul.f32 %v1385, 1.442695
  %v1387 = vpow.pop %v1386
  %v1388 = vadd.f32 %v1387, 1.0
  %v1389 = vrcp.pop %v1388
  %v1390 = vmul.f32 1.0, %v1389
  %v1391 = vadd.f32 %v1241, %v1312
  %v1392 = vxor.u32 %v1391, 2147483648
  %v1393 = vmul.f32 %v1392, 1.442695
  %v1394 = vpow.pop %v1393
  %v1395 = vadd.f32 %v1394, 1.0
  %v1396 = vrcp.pop %v1395
  %v1397 = vmul.f32 1.0, %v1396
  %v1398 = vadd.f32 %v1381, %v72
  %v1399 = vmul.f32 %v1390, %v1398
  %v1400 = vadd.f32 %v1242, %v1399
  %v1401 = vtanh.pop %v1400
  %v1402 = vsub.f32 1.0, %v1397
  %v1403 = vmul.f32 %v1402, %v1401
  %v1404 = vmul.f32 %v1397, %v1172
  %v1405 = vadd.f32 %v1403, %v1404
  %v1407 = vcombine.high %v1405, %v1405
  %v1409 = vunpack.c.l.s4 1966171168
  %v1410 = vunpack.c.0.s8 %v1409
  %v1411 = vlaneseq
  %v1412 = vshrl.u32 %v1411, 7
  %v1413 = vsub.s32 %v1410, %v1412
  %v1414 = vrot.slane %v1405, %v1413
  %v1416 = vunpack.c.l.s4 1966171168
  %v1417 = vunpack.c.0.s8 %v1416
  %v1418 = vlaneseq
  %v1419 = vshrl.u32 %v1418, 7
  %v1420 = vsub.s32 %v1417, %v1419
  %v1421 = vrot.slane %v1407, %v1420
  %v1422 = vcombine.high %v1414, %v1414
  %v1423 = vcombine.high %v1421, %v1421
  %v1425 = vunpack.c.l.s4 1966171168
  %v1426 = vunpack.c.0.s8 %v1425
  %v1427 = vlaneseq
  %v1428 = vshrl.u32 %v1427, 7
  %v1429 = vsub.s32 %v1426, %v1428
  %v1430 = vrot.slane %v1414, %v1429
  %v1432 = vunpack.c.l.s4 1966171168
  %v1433 = vunpack.c.0.s8 %v1432
  %v1434 = vlaneseq
  %v1435 = vshrl.u32 %v1434, 7
  %v1436 = vsub.s32 %v1433, %v1435
  %v1437 = vrot.slane %v1421, %v1436
  %v1439 = vunpack.c.l.s4 1966171168
  %v1440 = vunpack.c.0.s8 %v1439
  %v1441 = vlaneseq
  %v1442 = vshrl.u32 %v1441, 7
  %v1443 = vsub.s32 %v1440, %v1442
  %v1444 = vrot.slane %v1422, %v1443
  %v1446 = vunpack.c.l.s4 1966171168
  %v1447 = vunpack.c.0.s8 %v1446
  %v1448 = vlaneseq
  %v1449 = vshrl.u32 %v1448, 7
  %v1450 = vsub.s32 %v1447, %v1449
  %v1451 = vrot.slane %v1423, %v1450
  %v1452 = vcombine.high %v1430, %v1430
  %v1453 = vcombine.high %v1437, %v1437
  %v1454 = vcombine.high %v1444, %v1444
  %v1455 = vcombine.high %v1451, %v1451
  %1464 = vst [vmem:[#allocation3 + $0x5] sm:$0x1] %v1430
  %1465 = vst [vmem:[#allocation3 + $0xd] sm:$0x1] %v1444
  %1466 = vst [vmem:[#allocation3 + $0x15] sm:$0x1] %v1452
  %1467 = vst [vmem:[#allocation3 + $0x1d] sm:$0x1] %v1454
  %1468 = vst [vmem:[#allocation3 + $0x25] sm:$0x1] %v1437
  %1469 = vst [vmem:[#allocation3 + $0x2d] sm:$0x1] %v1451
  %1470 = vst [vmem:[#allocation3 + $0x35] sm:$0x1] %v1453
  %1471 = vst [vmem:[#allocation3 + $0x3d] sm:$0x1] %v1455
  %s1472 = scalar_lea.vmem %s0, 144
  %v1473 = vld [vmem:[%s1472] sm:$0xff]
  %v1474 = vld [vmem:[%s1472 + $0x8] sm:$0xff]
  %v1475 = vld [vmem:[%s1472 + $0x10] sm:$0xff]
  %1476 = vmatprep.subr.mxu0 %v20
  %1477 = vmatpush1.msra.mxu0 %v19
  %1478 = vmatprep.subr.mxu0 %v23
  %1479 = vmatpush1.msra.mxu0 %v22
  %1480 = vmatprep.subr.mxu0 %v26
  %1481 = vmatpush1.msra.mxu0 %v25
  %1482 = vmatprep.subr.mxu0 %v29
  %1483 = vmatpush1.msra.mxu0 %v28
  %1484 = vmatprep.subr.mxu0 %v32
  %1485 = vmatpush1.msra.mxu0 %v31
  %1486 = vmatprep.subr.mxu0 %v35
  %1487 = vmatpush1.msra.mxu0 %v34
  %1488 = vmatprep.subr.mxu0 %v38
  %1489 = vmatpush1.msra.mxu0 %v37
  %1490 = vmatprep.subr.mxu0 %v41
  %1491 = vmatpush1.msra.mxu0 %v40
  %1492 = vmatprep.subr.mxu0 %v44
  %1493 = vmatpush1.msra.mxu0 %v43
  %1494 = vmatprep.subr.mxu0 %v47
  %1495 = vmatpush1.msra.mxu0 %v46
  %1496 = vmatprep.subr.mxu0 %v50
  %1497 = vmatpush1.msra.mxu0 %v49
  %1498 = vmatprep.subr.mxu0 %v53
  %1499 = vmatpush1.msra.mxu0 %v52
  %1500 = vmatprep.subr.mxu0 %v56
  %1501 = vmatpush1.msra.mxu0 %v55
  %1502 = vmatprep.subr.mxu0 %v59
  %1503 = vmatpush1.msra.mxu0 %v58
  %1504 = vmatprep.subr.mxu0 %v62
  %1505 = vmatpush1.msra.mxu0 %v61
  %1506 = vmatprep.subr.mxu0 %v65
  %1507 = vmatpush1.msra.mxu0 %v64
  %1508 = vmatprep.subr.mxu0 0.0
  %1509 = vmatpush1.msra.mxu0 0.0
  %1510 = vmatprep.subr.mxu0 0.0
  %1511 = vmatpush1.msra.mxu0 0.0
  %1512 = vmatprep.subr.mxu0 0.0
  %1513 = vmatpush1.msra.mxu0 0.0
  %1514 = vmatprep.subr.mxu0 0.0
  %1515 = vmatpush1.msra.mxu0 0.0
  %1516 = vmatprep.subr.mxu0 0.0
  %1517 = vmatpush1.msra.mxu0 0.0
  %1518 = vmatprep.subr.mxu0 0.0
  %1519 = vmatpush1.msra.mxu0 0.0
  %1520 = vmatprep.subr.mxu0 0.0
  %1521 = vmatpush1.msra.mxu0 0.0
  %1522 = vmatprep.subr.mxu0 0.0
  %1523 = vmatpush1.msra.mxu0 0.0
  %1524 = vmatprep.subr.mxu0 0.0
  %1525 = vmatpush1.msra.mxu0 0.0
  %1526 = vmatprep.subr.mxu0 0.0
  %1527 = vmatpush1.msra.mxu0 0.0
  %1528 = vmatprep.subr.mxu0 0.0
  %1529 = vmatpush1.msra.mxu0 0.0
  %1530 = vmatprep.subr.mxu0 0.0
  %1531 = vmatpush1.msra.mxu0 0.0
  %1532 = vmatprep.subr.mxu0 0.0
  %1533 = vmatpush1.msra.mxu0 0.0
  %1534 = vmatprep.subr.mxu0 0.0
  %1535 = vmatpush1.msra.mxu0 0.0
  %1536 = vmatprep.subr.mxu0 0.0
  %1537 = vmatpush1.msra.mxu0 0.0
  %1538 = vmatprep.subr.mxu0 0.0
  %1539 = vmatpush1.msra.mxu0 0.0
  %1540 = vmatprep.mubr.f32.mxu0 0.0
  %1541 = vmatmul.mubr.f32.gmra.mrb[0].mxu0 %v1405
  %v1542 = vpop.f32.mrb[0].mxu0
  %v1543 = vadd.f32 0.0, %v1542
  %v1544 = vpop.f32.mrb[0].mxu0
  %v1545 = vadd.f32 0.0, %v1544
  %1546 = vdwg.mxu0
  %1547 = vmatprep.subr.mxu0 0.0
  %1548 = vmatpush1.msra.mxu0 %v21
  %1549 = vmatprep.subr.mxu0 0.0
  %1550 = vmatpush1.msra.mxu0 %v24
  %1551 = vmatprep.subr.mxu0 0.0
  %1552 = vmatpush1.msra.mxu0 %v27
  %1553 = vmatprep.subr.mxu0 0.0
  %1554 = vmatpush1.msra.mxu0 %v30
  %1555 = vmatprep.subr.mxu0 0.0
  %1556 = vmatpush1.msra.mxu0 %v33
  %1557 = vmatprep.subr.mxu0 0.0
  %1558 = vmatpush1.msra.mxu0 %v36
  %1559 = vmatprep.subr.mxu0 0.0
  %1560 = vmatpush1.msra.mxu0 %v39
  %1561 = vmatprep.subr.mxu0 0.0
  %1562 = vmatpush1.msra.mxu0 %v42
  %1563 = vmatprep.subr.mxu0 0.0
  %1564 = vmatpush1.msra.mxu0 %v45
  %1565 = vmatprep.subr.mxu0 0.0
  %1566 = vmatpush1.msra.mxu0 %v48
  %1567 = vmatprep.subr.mxu0 0.0
  %1568 = vmatpush1.msra.mxu0 %v51
  %1569 = vmatprep.subr.mxu0 0.0
  %1570 = vmatpush1.msra.mxu0 %v54
  %1571 = vmatprep.subr.mxu0 0.0
  %1572 = vmatpush1.msra.mxu0 %v57
  %1573 = vmatprep.subr.mxu0 0.0
  %1574 = vmatpush1.msra.mxu0 %v60
  %1575 = vmatprep.subr.mxu0 0.0
  %1576 = vmatpush1.msra.mxu0 %v63
  %1577 = vmatprep.subr.mxu0 0.0
  %1578 = vmatpush1.msra.mxu0 %v66
  %1579 = vmatprep.subr.mxu0 0.0
  %1580 = vmatpush1.msra.mxu0 0.0
  %1581 = vmatprep.subr.mxu0 0.0
  %1582 = vmatpush1.msra.mxu0 0.0
  %1583 = vmatprep.subr.mxu0 0.0
  %1584 = vmatpush1.msra.mxu0 0.0
  %1585 = vmatprep.subr.mxu0 0.0
  %1586 = vmatpush1.msra.mxu0 0.0
  %1587 = vmatprep.subr.mxu0 0.0
  %1588 = vmatpush1.msra.mxu0 0.0
  %1589 = vmatprep.subr.mxu0 0.0
  %1590 = vmatpush1.msra.mxu0 0.0
  %1591 = vmatprep.subr.mxu0 0.0
  %1592 = vmatpush1.msra.mxu0 0.0
  %1593 = vmatprep.subr.mxu0 0.0
  %1594 = vmatpush1.msra.mxu0 0.0
  %1595 = vmatprep.subr.mxu0 0.0
  %1596 = vmatpush1.msra.mxu0 0.0
  %1597 = vmatprep.subr.mxu0 0.0
  %1598 = vmatpush1.msra.mxu0 0.0
  %1599 = vmatprep.subr.mxu0 0.0
  %1600 = vmatpush1.msra.mxu0 0.0
  %1601 = vmatprep.subr.mxu0 0.0
  %1602 = vmatpush1.msra.mxu0 0.0
  %1603 = vmatprep.subr.mxu0 0.0
  %1604 = vmatpush1.msra.mxu0 0.0
  %1605 = vmatprep.subr.mxu0 0.0
  %1606 = vmatpush1.msra.mxu0 0.0
  %1607 = vmatprep.subr.mxu0 0.0
  %1608 = vmatpush1.msra.mxu0 0.0
  %1609 = vmatprep.subr.mxu0 0.0
  %1610 = vmatpush1.msra.mxu0 0.0
  %1611 = vmatprep.mubr.f32.mxu0 0.0
  %1612 = vmatmul.mubr.f32.gmra.mrb[0].mxu0 %v1405
  %v1613 = vpop.f32.mrb[0].mxu0
  %v1614 = vadd.f32 0.0, %v1613
  %v1615 = vpop.f32.mrb[0].mxu0
  %1616 = vdwg.mxu0
  %v1617 = vadd.f32 %v1473, %v1543
  %v1618 = vxor.u32 %v1617, 2147483648
  %v1619 = vmul.f32 %v1618, 1.442695
  %v1620 = vpow.pop %v1619
  %v1621 = vadd.f32 %v1620, 1.0
  %v1622 = vrcp.pop %v1621
  %v1623 = vmul.f32 1.0, %v1622
  %v1624 = vadd.f32 %v1474, %v1545
  %v1625 = vxor.u32 %v1624, 2147483648
  %v1626 = vmul.f32 %v1625, 1.442695
  %v1627 = vpow.pop %v1626
  %v1628 = vadd.f32 %v1627, 1.0
  %v1629 = vrcp.pop %v1628
  %v1630 = vmul.f32 1.0, %v1629
  %v1631 = vadd.f32 %v1614, %v72
  %v1632 = vmul.f32 %v1623, %v1631
  %v1633 = vadd.f32 %v1475, %v1632
  %v1634 = vtanh.pop %v1633
  %v1635 = vsub.f32 1.0, %v1630
  %v1636 = vmul.f32 %v1635, %v1634
  %v1637 = vmul.f32 %v1630, %v1405
  %v1638 = vadd.f32 %v1636, %v1637
  %v1640 = vcombine.high %v1638, %v1638
  %v1642 = vunpack.c.l.s4 1966171168
  %v1643 = vunpack.c.0.s8 %v1642
  %v1644 = vlaneseq
  %v1645 = vshrl.u32 %v1644, 7
  %v1646 = vsub.s32 %v1643, %v1645
  %v1647 = vrot.slane %v1638, %v1646
  %v1649 = vunpack.c.l.s4 1966171168
  %v1650 = vunpack.c.0.s8 %v1649
  %v1651 = vlaneseq
  %v1652 = vshrl.u32 %v1651, 7
  %v1653 = vsub.s32 %v1650, %v1652
  %v1654 = vrot.slane %v1640, %v1653
  %v1655 = vcombine.high %v1647, %v1647
  %v1656 = vcombine.high %v1654, %v1654
  %v1658 = vunpack.c.l.s4 1966171168
  %v1659 = vunpack.c.0.s8 %v1658
  %v1660 = vlaneseq
  %v1661 = vshrl.u32 %v1660, 7
  %v1662 = vsub.s32 %v1659, %v1661
  %v1663 = vrot.slane %v1647, %v1662
  %v1665 = vunpack.c.l.s4 1966171168
  %v1666 = vunpack.c.0.s8 %v1665
  %v1667 = vlaneseq
  %v1668 = vshrl.u32 %v1667, 7
  %v1669 = vsub.s32 %v1666, %v1668
  %v1670 = vrot.slane %v1654, %v1669
  %v1672 = vunpack.c.l.s4 1966171168
  %v1673 = vunpack.c.0.s8 %v1672
  %v1674 = vlaneseq
  %v1675 = vshrl.u32 %v1674, 7
  %v1676 = vsub.s32 %v1673, %v1675
  %v1677 = vrot.slane %v1655, %v1676
  %v1679 = vunpack.c.l.s4 1966171168
  %v1680 = vunpack.c.0.s8 %v1679
  %v1681 = vlaneseq
  %v1682 = vshrl.u32 %v1681, 7
  %v1683 = vsub.s32 %v1680, %v1682
  %v1684 = vrot.slane %v1656, %v1683
  %v1685 = vcombine.high %v1663, %v1663
  %v1686 = vcombine.high %v1670, %v1670
  %v1687 = vcombine.high %v1677, %v1677
  %v1688 = vcombine.high %v1684, %v1684
  %1697 = vst [vmem:[#allocation3 + $0x6] sm:$0x1] %v1663
  %1698 = vst [vmem:[#allocation3 + $0xe] sm:$0x1] %v1677
  %1699 = vst [vmem:[#allocation3 + $0x16] sm:$0x1] %v1685
  %1700 = vst [vmem:[#allocation3 + $0x1e] sm:$0x1] %v1687
  %1701 = vst [vmem:[#allocation3 + $0x26] sm:$0x1] %v1670
  %1702 = vst [vmem:[#allocation3 + $0x2e] sm:$0x1] %v1684
  %1703 = vst [vmem:[#allocation3 + $0x36] sm:$0x1] %v1686
  %1704 = vst [vmem:[#allocation3 + $0x3e] sm:$0x1] %v1688
  %s1705 = scalar_lea.vmem %s0, 168
  %v1706 = vld [vmem:[%s1705] sm:$0xff]
  %v1707 = vld [vmem:[%s1705 + $0x8] sm:$0xff]
  %v1708 = vld [vmem:[%s1705 + $0x10] sm:$0xff]
  %1709 = vmatprep.subr.mxu0 %v20
  %1710 = vmatpush1.msra.mxu0 %v19
  %1711 = vmatprep.subr.mxu0 %v23
  %1712 = vmatpush1.msra.mxu0 %v22
  %1713 = vmatprep.subr.mxu0 %v26
  %1714 = vmatpush1.msra.mxu0 %v25
  %1715 = vmatprep.subr.mxu0 %v29
  %1716 = vmatpush1.msra.mxu0 %v28
  %1717 = vmatprep.subr.mxu0 %v32
  %1718 = vmatpush1.msra.mxu0 %v31
  %1719 = vmatprep.subr.mxu0 %v35
  %1720 = vmatpush1.msra.mxu0 %v34
  %1721 = vmatprep.subr.mxu0 %v38
  %1722 = vmatpush1.msra.mxu0 %v37
  %1723 = vmatprep.subr.mxu0 %v41
  %1724 = vmatpush1.msra.mxu0 %v40
  %1725 = vmatprep.subr.mxu0 %v44
  %1726 = vmatpush1.msra.mxu0 %v43
  %1727 = vmatprep.subr.mxu0 %v47
  %1728 = vmatpush1.msra.mxu0 %v46
  %1729 = vmatprep.subr.mxu0 %v50
  %1730 = vmatpush1.msra.mxu0 %v49
  %1731 = vmatprep.subr.mxu0 %v53
  %1732 = vmatpush1.msra.mxu0 %v52
  %1733 = vmatprep.subr.mxu0 %v56
  %1734 = vmatpush1.msra.mxu0 %v55
  %1735 = vmatprep.subr.mxu0 %v59
  %1736 = vmatpush1.msra.mxu0 %v58
  %1737 = vmatprep.subr.mxu0 %v62
  %1738 = vmatpush1.msra.mxu0 %v61
  %1739 = vmatprep.subr.mxu0 %v65
  %1740 = vmatpush1.msra.mxu0 %v64
  %1741 = vmatprep.subr.mxu0 0.0
  %1742 = vmatpush1.msra.mxu0 0.0
  %1743 = vmatprep.subr.mxu0 0.0
  %1744 = vmatpush1.msra.mxu0 0.0
  %1745 = vmatprep.subr.mxu0 0.0
  %1746 = vmatpush1.msra.mxu0 0.0
  %1747 = vmatprep.subr.mxu0 0.0
  %1748 = vmatpush1.msra.mxu0 0.0
  %1749 = vmatprep.subr.mxu0 0.0
  %1750 = vmatpush1.msra.mxu0 0.0
  %1751 = vmatprep.subr.mxu0 0.0
  %1752 = vmatpush1.msra.mxu0 0.0
  %1753 = vmatprep.subr.mxu0 0.0
  %1754 = vmatpush1.msra.mxu0 0.0
  %1755 = vmatprep.subr.mxu0 0.0
  %1756 = vmatpush1.msra.mxu0 0.0
  %1757 = vmatprep.subr.mxu0 0.0
  %1758 = vmatpush1.msra.mxu0 0.0
  %1759 = vmatprep.subr.mxu0 0.0
  %1760 = vmatpush1.msra.mxu0 0.0
  %1761 = vmatprep.subr.mxu0 0.0
  %1762 = vmatpush1.msra.mxu0 0.0
  %1763 = vmatprep.subr.mxu0 0.0
  %1764 = vmatpush1.msra.mxu0 0.0
  %1765 = vmatprep.subr.mxu0 0.0
  %1766 = vmatpush1.msra.mxu0 0.0
  %1767 = vmatprep.subr.mxu0 0.0
  %1768 = vmatpush1.msra.mxu0 0.0
  %1769 = vmatprep.subr.mxu0 0.0
  %1770 = vmatpush1.msra.mxu0 0.0
  %1771 = vmatprep.subr.mxu0 0.0
  %1772 = vmatpush1.msra.mxu0 0.0
  %1773 = vmatprep.mubr.f32.mxu0 0.0
  %1774 = vmatmul.mubr.f32.gmra.mrb[0].mxu0 %v1638
  %v1775 = vpop.f32.mrb[0].mxu0
  %v1776 = vadd.f32 0.0, %v1775
  %v1777 = vpop.f32.mrb[0].mxu0
  %v1778 = vadd.f32 0.0, %v1777
  %1779 = vdwg.mxu0
  %1780 = vmatprep.subr.mxu0 0.0
  %1781 = vmatpush1.msra.mxu0 %v21
  %1782 = vmatprep.subr.mxu0 0.0
  %1783 = vmatpush1.msra.mxu0 %v24
  %1784 = vmatprep.subr.mxu0 0.0
  %1785 = vmatpush1.msra.mxu0 %v27
  %1786 = vmatprep.subr.mxu0 0.0
  %1787 = vmatpush1.msra.mxu0 %v30
  %1788 = vmatprep.subr.mxu0 0.0
  %1789 = vmatpush1.msra.mxu0 %v33
  %1790 = vmatprep.subr.mxu0 0.0
  %1791 = vmatpush1.msra.mxu0 %v36
  %1792 = vmatprep.subr.mxu0 0.0
  %1793 = vmatpush1.msra.mxu0 %v39
  %1794 = vmatprep.subr.mxu0 0.0
  %1795 = vmatpush1.msra.mxu0 %v42
  %1796 = vmatprep.subr.mxu0 0.0
  %1797 = vmatpush1.msra.mxu0 %v45
  %1798 = vmatprep.subr.mxu0 0.0
  %1799 = vmatpush1.msra.mxu0 %v48
  %1800 = vmatprep.subr.mxu0 0.0
  %1801 = vmatpush1.msra.mxu0 %v51
  %1802 = vmatprep.subr.mxu0 0.0
  %1803 = vmatpush1.msra.mxu0 %v54
  %1804 = vmatprep.subr.mxu0 0.0
  %1805 = vmatpush1.msra.mxu0 %v57
  %1806 = vmatprep.subr.mxu0 0.0
  %1807 = vmatpush1.msra.mxu0 %v60
  %1808 = vmatprep.subr.mxu0 0.0
  %1809 = vmatpush1.msra.mxu0 %v63
  %1810 = vmatprep.subr.mxu0 0.0
  %1811 = vmatpush1.msra.mxu0 %v66
  %1812 = vmatprep.subr.mxu0 0.0
  %1813 = vmatpush1.msra.mxu0 0.0
  %1814 = vmatprep.subr.mxu0 0.0
  %1815 = vmatpush1.msra.mxu0 0.0
  %1816 = vmatprep.subr.mxu0 0.0
  %1817 = vmatpush1.msra.mxu0 0.0
  %1818 = vmatprep.subr.mxu0 0.0
  %1819 = vmatpush1.msra.mxu0 0.0
  %1820 = vmatprep.subr.mxu0 0.0
  %1821 = vmatpush1.msra.mxu0 0.0
  %1822 = vmatprep.subr.mxu0 0.0
  %1823 = vmatpush1.msra.mxu0 0.0
  %1824 = vmatprep.subr.mxu0 0.0
  %1825 = vmatpush1.msra.mxu0 0.0
  %1826 = vmatprep.subr.mxu0 0.0
  %1827 = vmatpush1.msra.mxu0 0.0
  %1828 = vmatprep.subr.mxu0 0.0
  %1829 = vmatpush1.msra.mxu0 0.0
  %1830 = vmatprep.subr.mxu0 0.0
  %1831 = vmatpush1.msra.mxu0 0.0
  %1832 = vmatprep.subr.mxu0 0.0
  %1833 = vmatpush1.msra.mxu0 0.0
  %1834 = vmatprep.subr.mxu0 0.0
  %1835 = vmatpush1.msra.mxu0 0.0
  %1836 = vmatprep.subr.mxu0 0.0
  %1837 = vmatpush1.msra.mxu0 0.0
  %1838 = vmatprep.subr.mxu0 0.0
  %1839 = vmatpush1.msra.mxu0 0.0
  %1840 = vmatprep.subr.mxu0 0.0
  %1841 = vmatpush1.msra.mxu0 0.0
  %1842 = vmatprep.subr.mxu0 0.0
  %1843 = vmatpush1.msra.mxu0 0.0
  %1844 = vmatprep.mubr.f32.mxu0 0.0
  %1845 = vmatmul.mubr.f32.gmra.mrb[0].mxu0 %v1638
  %v1846 = vpop.f32.mrb[0].mxu0
  %v1847 = vadd.f32 0.0, %v1846
  %v1848 = vpop.f32.mrb[0].mxu0
  %1849 = vdwg.mxu0
  %v1850 = vadd.f32 %v1706, %v1776
  %v1851 = vxor.u32 %v1850, 2147483648
  %v1852 = vmul.f32 %v1851, 1.442695
  %v1853 = vpow.pop %v1852
  %v1854 = vadd.f32 %v1853, 1.0
  %v1855 = vrcp.pop %v1854
  %v1856 = vmul.f32 1.0, %v1855
  %v1857 = vadd.f32 %v1707, %v1778
  %v1858 = vxor.u32 %v1857, 2147483648
  %v1859 = vmul.f32 %v1858, 1.442695
  %v1860 = vpow.pop %v1859
  %v1861 = vadd.f32 %v1860, 1.0
  %v1862 = vrcp.pop %v1861
  %v1863 = vmul.f32 1.0, %v1862
  %v1864 = vadd.f32 %v1847, %v72
  %v1865 = vmul.f32 %v1856, %v1864
  %v1866 = vadd.f32 %v1708, %v1865
  %v1867 = vtanh.pop %v1866
  %v1868 = vsub.f32 1.0, %v1863
  %v1869 = vmul.f32 %v1868, %v1867
  %v1870 = vmul.f32 %v1863, %v1638
  %v1871 = vadd.f32 %v1869, %v1870
  %v1873 = vcombine.high %v1871, %v1871
  %v1875 = vunpack.c.l.s4 1966171168
  %v1876 = vunpack.c.0.s8 %v1875
  %v1877 = vlaneseq
  %v1878 = vshrl.u32 %v1877, 7
  %v1879 = vsub.s32 %v1876, %v1878
  %v1880 = vrot.slane %v1871, %v1879
  %v1882 = vunpack.c.l.s4 1966171168
  %v1883 = vunpack.c.0.s8 %v1882
  %v1884 = vlaneseq
  %v1885 = vshrl.u32 %v1884, 7
  %v1886 = vsub.s32 %v1883, %v1885
  %v1887 = vrot.slane %v1873, %v1886
  %v1888 = vcombine.high %v1880, %v1880
  %v1889 = vcombine.high %v1887, %v1887
  %v1891 = vunpack.c.l.s4 1966171168
  %v1892 = vunpack.c.0.s8 %v1891
  %v1893 = vlaneseq
  %v1894 = vshrl.u32 %v1893, 7
  %v1895 = vsub.s32 %v1892, %v1894
  %v1896 = vrot.slane %v1880, %v1895
  %v1898 = vunpack.c.l.s4 1966171168
  %v1899 = vunpack.c.0.s8 %v1898
  %v1900 = vlaneseq
  %v1901 = vshrl.u32 %v1900, 7
  %v1902 = vsub.s32 %v1899, %v1901
  %v1903 = vrot.slane %v1887, %v1902
  %v1905 = vunpack.c.l.s4 1966171168
  %v1906 = vunpack.c.0.s8 %v1905
  %v1907 = vlaneseq
  %v1908 = vshrl.u32 %v1907, 7
  %v1909 = vsub.s32 %v1906, %v1908
  %v1910 = vrot.slane %v1888, %v1909
  %v1912 = vunpack.c.l.s4 1966171168
  %v1913 = vunpack.c.0.s8 %v1912
  %v1914 = vlaneseq
  %v1915 = vshrl.u32 %v1914, 7
  %v1916 = vsub.s32 %v1913, %v1915
  %v1917 = vrot.slane %v1889, %v1916
  %v1918 = vcombine.high %v1896, %v1896
  %v1919 = vcombine.high %v1903, %v1903
  %v1920 = vcombine.high %v1910, %v1910
  %v1921 = vcombine.high %v1917, %v1917
  %1930 = vst [vmem:[#allocation3 + $0x7] sm:$0x1] %v1896
  %1931 = vst [vmem:[#allocation3 + $0xf] sm:$0x1] %v1910
  %1932 = vst [vmem:[#allocation3 + $0x17] sm:$0x1] %v1918
  %1933 = vst [vmem:[#allocation3 + $0x1f] sm:$0x1] %v1920
  %1934 = vst [vmem:[#allocation3 + $0x27] sm:$0x1] %v1903
  %1935 = vst [vmem:[#allocation3 + $0x2f] sm:$0x1] %v1917
  %1936 = vst [vmem:[#allocation3 + $0x37] sm:$0x1] %v1919
  %1937 = vst [vmem:[#allocation3 + $0x3f] sm:$0x1] %v1921
  %v1938 = vld [vmem:[#allocation3] sm:$0xff]
  %v1939 = vld [vmem:[#allocation3 + $0x8] sm:$0xff]
  %v1940 = vld [vmem:[#allocation3 + $0x10] sm:$0xff]
  %v1941 = vld [vmem:[#allocation3 + $0x18] sm:$0xff]
  %v1942 = vld [vmem:[#allocation3 + $0x20] sm:$0xff]
  %v1943 = vld [vmem:[#allocation3 + $0x28] sm:$0xff]
  %v1944 = vld [vmem:[#allocation3 + $0x30] sm:$0xff]
  %v1945 = vld [vmem:[#allocation3 + $0x38] sm:$0xff]
  %1946 = vst [vmem:[%s3] sm:$0xff] %v1938
  %1947 = vst [vmem:[%s3 + $0x8] sm:$0xff] %v1939
  %1948 = vst [vmem:[%s3 + $0x10] sm:$0xff] %v1940
  %1949 = vst [vmem:[%s3 + $0x18] sm:$0xff] %v1941
  %1950 = vst [vmem:[%s3 + $0x20] sm:$0xff] %v1942
  %1951 = vst [vmem:[%s3 + $0x28] sm:$0xff] %v1943
  %1952 = vst [vmem:[%s3 + $0x30] sm:$0xff] %v1944
  %1953 = vst [vmem:[%s3 + $0x38] sm:$0xff] %v1945
  %1954 = vst [vmem:[#allocation2] sm:$0xff] %v1871
  // Predicated region
  $region18: #{decoder_gru_forward.2} parent=0 // pred_check
    _
  $region19: #{decoder_gru_forward.2} parent=0 // pred_check_branch
    %1956 = sbr.rel (0) target = $region21
  $region20: #{decoder_gru_forward.2} parent=0 // pred_region
    _
  $region21: #{decoder_gru_forward.2} parent=0 // pred_fallthru
    _
  // Predicated region
  $region22: #{decoder_gru_forward.2} parent=0 // pred_check
    _
  $region23: #{decoder_gru_forward.2} parent=0 // pred_check_branch
    %1958 = sbr.rel (0) target = $region25
  $region24: #{decoder_gru_forward.2} parent=0 // pred_region
    _
  $region25: #{decoder_gru_forward.2} parent=0 // pred_fallthru
    _

</llo_original>
